<compile_context>
chip_gen: v7x
topology: tpu7x:2x2x1
jax: 0.10.0
libtpu: 0.0.40
codegen_flags: <defaults>
</compile_context>

<pallas_src>
import functools

import jax
import jax.numpy as jnp
from jax.experimental import pallas as pl
from jax.experimental.pallas import tpu as pltpu

LANE = 128
SUBLANE = 8


def _round_up(x, m):
    return (x + m - 1) // m * m


# ---------------------------------------------------------------------------
# Kernel
# ---------------------------------------------------------------------------
def qnet_twin_duel_kernel(x_ref,
                          ws1_ref, bs1_ref, ws2_ref, bs2_ref,
                          wh_ref, bh_ref,
                          wv1b_ref, bv1b_ref,
                          wa1b_ref, ba1b_ref,
                          out_ref, *, mid_pad):
    cdt = ws1_ref.dtype  # matmul compute dtype (bf16 by default, f32 optional)
    x = x_ref[...]

    # Shared state trunk: Linear -> ReLU -> Linear -> ReLU (f32 accumulation).
    h = jnp.dot(x.astype(cdt), ws1_ref[...],
                preferred_element_type=jnp.float32) + bs1_ref[...]
    h = jnp.maximum(h, 0.0)
    t = jnp.dot(h.astype(cdt), ws2_ref[...],
                preferred_element_type=jnp.float32) + bs2_ref[...]
    t = jnp.maximum(t, 0.0)

    # Fused head layer-1: [net_val1[0] | net_adv1[0]] as one (M_P, 2*M_P) matmul.
    va = jnp.dot(t.astype(cdt), wh_ref[...],
                 preferred_element_type=jnp.float32) + bh_ref[...]
    va = jnp.maximum(va, 0.0)
    v = va[:, :mid_pad]   # value-head hidden  (tile_b, M_P)
    a = va[:, mid_pad:]   # adv-head hidden    (tile_b, M_P)

    # Value head output (mid -> 1): VPU multiply + XLU lane reduce.  Keeping
    # this off the MXU avoids an N=1 systolic push/pop (review item #9).
    val = jnp.sum(v * wv1b_ref[...], axis=-1, keepdims=True) + bv1b_ref[...]

    # Advantage head layer 2.  Weights/bias were mean-centered at prep time,
    # so q = val + adv_centered exactly (no in-kernel mean reduction needed).
    adv_c = jnp.dot(a.astype(cdt), wa1b_ref[...],
                    preferred_element_type=jnp.float32) + ba1b_ref[...]

    out_ref[...] = val + adv_c


# ---------------------------------------------------------------------------
# One-time parameter preparation (padding, fusion, centering, dtype cast).
# ---------------------------------------------------------------------------
def prepare_params(params, *, action_dim, compute_dtype=jnp.bfloat16):
    """Pad/fuse/cast the weights once; reuse across every forward() call."""
    state_dim, mid_dim = params["ws1"].shape
    S_P = _round_up(state_dim, LANE)
    M_P = _round_up(mid_dim, LANE)
    A_P = _round_up(action_dim, LANE)

    def pad2(a, rows, cols, dtype=None):
        a = jnp.pad(a, ((0, rows - a.shape[0]), (0, cols - a.shape[1])))
        return a.astype(dtype) if dtype is not None else a.astype(jnp.float32)

    cdt = compute_dtype
    ws1 = pad2(params["ws1"], S_P, M_P, cdt)
    bs1 = pad2(params["bs1"], 1, M_P)
    ws2 = pad2(params["ws2"], M_P, M_P, cdt)
    bs2 = pad2(params["bs2"], 1, M_P)

    # Fuse the two head first layers into one (M_P, 2*M_P) matmul.
    wh = jnp.concatenate([pad2(params["wv1a"], M_P, M_P),
                          pad2(params["wa1a"], M_P, M_P)], axis=1).astype(cdt)
    bh = jnp.concatenate([pad2(params["bv1a"], 1, M_P),
                          pad2(params["ba1a"], 1, M_P)], axis=1)

    # Value output layer (mid, 1) -> row vector for the VPU mul + reduce path.
    wv1b = pad2(params["wv1b"].reshape(1, mid_dim), 1, M_P)  # keep f32
    bv1b = params["bv1b"].reshape(1, 1).astype(jnp.float32)

    # Fold dueling-mean centering into the advantage output layer (exact):
    #   q_j = val + x.(w_j - mean_k w_k) + (b_j - mean_k b_k)
    wa1b_c = params["wa1b"] - params["wa1b"].mean(axis=1, keepdims=True)
    ba1b_c = params["ba1b"] - params["ba1b"].mean(axis=1, keepdims=True)
    wa1b_c = pad2(wa1b_c, M_P, A_P, cdt)
    ba1b_c = pad2(ba1b_c, 1, A_P)

    weights = (ws1, bs1, ws2, bs2, wh, bh, wv1b, bv1b, wa1b_c, ba1b_c)
    dims = dict(state_dim=state_dim, mid_dim=mid_dim, action_dim=action_dim,
                S_P=S_P, M_P=M_P, A_P=A_P)
    return weights, dims


# ---------------------------------------------------------------------------
# Forward wrapper
# ---------------------------------------------------------------------------
def qnet_twin_duel_forward(state, prepped, *, max_tile_b=1024):
    """state: (B, state_dim) f32; prepped: output of prepare_params()."""
    weights, dims = prepped
    B, state_dim = state.shape
    assert state_dim == dims["state_dim"]
    S_P, M_P, A_P = dims["S_P"], dims["M_P"], dims["A_P"]
    action_dim = dims["action_dim"]

    # Large batch tile to amortize per-grid-step overhead (~0.35 us/step).
    tile_b = min(max_tile_b, _round_up(B, SUBLANE))
    # v7x has 2 TensorCores: keep >= 2 parallel grid steps when batch allows.
    if _round_up(B, tile_b) == tile_b and tile_b > SUBLANE:
        tile_b = _round_up((tile_b + 1) // 2, SUBLANE)
    B_P = _round_up(B, tile_b)
    grid = (B_P // tile_b,)

    # Only the activations are padded per call; weights were prepped once.
    x_p = jnp.pad(state.astype(jnp.float32),
                  ((0, B_P - B), (0, S_P - state_dim)))

    flops = int(2 * B_P * (S_P * M_P + M_P * M_P + M_P * (2 * M_P)
                           + M_P + M_P * A_P))
    bytes_accessed = int(4 * (B_P * S_P + B_P * A_P)
                         + sum(int(w.size) * w.dtype.itemsize for w in weights))

    def run(single_buffer_weights):
        def resident(w):
            # Constant block index across the batch axis => VMEM-resident.
            if single_buffer_weights:
                return pl.BlockSpec(w.shape, lambda i: (0, 0),
                                    pipeline_mode=pl.Buffered(buffer_count=1))
            return pl.BlockSpec(w.shape, lambda i: (0, 0))

        in_specs = ([pl.BlockSpec((tile_b, S_P), lambda i: (i, 0))]
                    + [resident(w) for w in weights])
        fn = pl.pallas_call(
            functools.partial(qnet_twin_duel_kernel, mid_pad=M_P),
            out_shape=jax.ShapeDtypeStruct((B_P, A_P), jnp.float32),
            grid=grid,
            in_specs=in_specs,
            out_specs=pl.BlockSpec((tile_b, A_P), lambda i: (i, 0)),
            compiler_params=pltpu.CompilerParams(
                dimension_semantics=("parallel",)),
            cost_estimate=pl.CostEstimate(flops=flops, transcendentals=0,
                                          bytes_accessed=bytes_accessed),
        )
        return fn(x_p, *weights)

    try:
        out_p = run(True)            # single-buffered resident weights
    except Exception:                # fallback if Buffered(1) is unsupported
        out_p = run(False)

    # Slice away batch and action-dim padding (lane-dense store inside kernel).
    return out_p[:B, :action_dim]


# ---------------------------------------------------------------------------
# Init / reference (pure JAX)
# ---------------------------------------------------------------------------
def _linear_init(key, fan_in, fan_out):
    """PyTorch nn.Linear default init: U(-1/sqrt(fan_in), 1/sqrt(fan_in))."""
    kw, kb = jax.random.split(key)
    bound = 1.0 / jnp.sqrt(jnp.float32(fan_in))
    w = jax.random.uniform(kw, (fan_in, fan_out), jnp.float32, -bound, bound)
    b = jax.random.uniform(kb, (1, fan_out), jnp.float32, -bound, bound)
    return w, b


def make_params(key, state_dim, mid_dim, action_dim):
    # Only the layers used by forward(): net_state, net_val1, net_adv1.
    ks = jax.random.split(key, 6)
    ws1, bs1 = _linear_init(ks[0], state_dim, mid_dim)
    ws2, bs2 = _linear_init(ks[1], mid_dim, mid_dim)
    wv1a, bv1a = _linear_init(ks[2], mid_dim, mid_dim)
    wv1b, bv1b = _linear_init(ks[3], mid_dim, 1)
    wa1a, ba1a = _linear_init(ks[4], mid_dim, mid_dim)
    wa1b, ba1b = _linear_init(ks[5], mid_dim, action_dim)
    return dict(ws1=ws1, bs1=bs1, ws2=ws2, bs2=bs2,
                wv1a=wv1a, bv1a=bv1a, wv1b=wv1b, bv1b=bv1b,
                wa1a=wa1a, ba1a=ba1a, wa1b=wa1b, ba1b=ba1b)


def reference_forward(state, p):
    h = jnp.maximum(state @ p["ws1"] + p["bs1"], 0.0)
    t = jnp.maximum(h @ p["ws2"] + p["bs2"], 0.0)
    v = jnp.maximum(t @ p["wv1a"] + p["bv1a"], 0.0)
    val = v @ p["wv1b"] + p["bv1b"]                 # (B, 1)
    a = jnp.maximum(t @ p["wa1a"] + p["ba1a"], 0.0)
    adv = a @ p["wa1b"] + p["ba1b"]                 # (B, action_dim)
    return val + adv - adv.mean(axis=1, keepdims=True)


if __name__ == "__main__":
    key = jax.random.PRNGKey(0)
    k_state, k_params = jax.random.split(key)

    batch, state_dim, mid_dim, action_dim = 8, 16, 32, 4
    state = jax.random.normal(k_state, (batch, state_dim), jnp.float32)
    params = make_params(k_params, state_dim, mid_dim, action_dim)
    ref = reference_forward(state, params)

    # f32 compute path: fusion + mean-folding are algebraically exact.
    prepped_f32 = prepare_params(params, action_dim=action_dim,
                                 compute_dtype=jnp.float32)
    out_f32 = jax.block_until_ready(qnet_twin_duel_forward(state, prepped_f32))
    assert out_f32.shape == (batch, action_dim), out_f32.shape
    assert jnp.allclose(out_f32, ref, atol=1e-4, rtol=1e-4), (out_f32, ref)

    # bf16 matmul operands (f32 accumulation): relaxed tolerance vs f32 ref.
    prepped_bf16 = prepare_params(params, action_dim=action_dim,
                                  compute_dtype=jnp.bfloat16)
    out = jax.block_until_ready(qnet_twin_duel_forward(state, prepped_bf16))
    assert out.shape == (batch, action_dim), out.shape
    assert jnp.allclose(out, ref, atol=5e-2, rtol=5e-2), (out, ref)

    # TODO(synk): get_q1_q2 (twin heads net_val2/net_adv2) is not kernelized; only forward().
    print("KERNEL_OK")
</pallas_src>

<mosaic_0001>
module attributes {stable_mosaic.version = 11 : i64} {
  func.func @qnet_twin_duel_kernel(%arg0: i32, %arg1: memref<8x128xf32, #tpu.memory_space<vmem>>, %arg2: memref<128x128xf32, #tpu.memory_space<vmem>>, %arg3: memref<1x128xf32, #tpu.memory_space<vmem>>, %arg4: memref<128x128xf32, #tpu.memory_space<vmem>>, %arg5: memref<1x128xf32, #tpu.memory_space<vmem>>, %arg6: memref<128x256xf32, #tpu.memory_space<vmem>>, %arg7: memref<1x256xf32, #tpu.memory_space<vmem>>, %arg8: memref<1x128xf32, #tpu.memory_space<vmem>>, %arg9: memref<1x1xf32, #tpu.memory_space<vmem>>, %arg10: memref<128x128xf32, #tpu.memory_space<vmem>>, %arg11: memref<1x128xf32, #tpu.memory_space<vmem>>, %arg12: memref<8x128xf32, #tpu.memory_space<vmem>>) attributes {dimension_semantics = [#tpu.dimension_semantics<parallel>], iteration_bounds = array<i64: 1>, scalar_prefetch = 0 : i64, scratch_operands = 0 : i64, tpu.core_type = #tpu.core_type<tc>, window_params = [{transform_indices = @transform_0, window_bounds = array<i64: 8, 128>}, {pipeline_mode = #tpu.pipeline_mode<synchronous>, transform_indices = @transform_1, window_bounds = array<i64: 128, 128>}, {pipeline_mode = #tpu.pipeline_mode<synchronous>, transform_indices = @transform_2, window_bounds = array<i64: 1, 128>}, {pipeline_mode = #tpu.pipeline_mode<synchronous>, transform_indices = @transform_3, window_bounds = array<i64: 128, 128>}, {pipeline_mode = #tpu.pipeline_mode<synchronous>, transform_indices = @transform_4, window_bounds = array<i64: 1, 128>}, {pipeline_mode = #tpu.pipeline_mode<synchronous>, transform_indices = @transform_5, window_bounds = array<i64: 128, 256>}, {pipeline_mode = #tpu.pipeline_mode<synchronous>, transform_indices = @transform_6, window_bounds = array<i64: 1, 256>}, {pipeline_mode = #tpu.pipeline_mode<synchronous>, transform_indices = @transform_7, window_bounds = array<i64: 1, 128>}, {pipeline_mode = #tpu.pipeline_mode<synchronous>, transform_indices = @transform_8, window_bounds = array<i64: 1, 1>}, {pipeline_mode = #tpu.pipeline_mode<synchronous>, transform_indices = @transform_9, window_bounds = array<i64: 128, 128>}, {pipeline_mode = #tpu.pipeline_mode<synchronous>, transform_indices = @transform_10, window_bounds = array<i64: 1, 128>}, {transform_indices = @transform_11, window_bounds = array<i64: 8, 128>}]} {
    %c0 = arith.constant 0 : index
    %c0_0 = arith.constant 0 : index
    %0 = vector.load %arg1[%c0, %c0_0] : memref<8x128xf32, #tpu.memory_space<vmem>>, vector<8x128xf32>
    %c0_1 = arith.constant 0 : index
    %c0_2 = arith.constant 0 : index
    %1 = vector.load %arg2[%c0_1, %c0_2] : memref<128x128xf32, #tpu.memory_space<vmem>>, vector<128x128xf32>
    %cst = arith.constant dense<0.000000e+00> : vector<8x128xf32>
    %2 = tpu.matmul %0, %1, %cst {dimension_numbers = #tpu.dot_dimension_numbers<[1], [0], [0], [1], [0, 0, 1, 1], [], []>} : vector<8x128xf32>, vector<128x128xf32>, vector<8x128xf32> -> vector<8x128xf32>
    %c0_3 = arith.constant 0 : index
    %c0_4 = arith.constant 0 : index
    %3 = vector.load %arg3[%c0_3, %c0_4] : memref<1x128xf32, #tpu.memory_space<vmem>>, vector<1x128xf32>
    %4 = vector.broadcast %3 : vector<1x128xf32> to vector<8x128xf32>
    %5 = arith.addf %2, %4 : vector<8x128xf32>
    %cst_5 = arith.constant 0.000000e+00 : f32
    %6 = vector.broadcast %cst_5 : f32 to vector<8x128xf32>
    %7 = arith.maximumf %5, %6 : vector<8x128xf32>
    %c0_6 = arith.constant 0 : index
    %c0_7 = arith.constant 0 : index
    %8 = vector.load %arg4[%c0_6, %c0_7] : memref<128x128xf32, #tpu.memory_space<vmem>>, vector<128x128xf32>
    %cst_8 = arith.constant dense<0.000000e+00> : vector<8x128xf32>
    %9 = tpu.matmul %7, %8, %cst_8 {dimension_numbers = #tpu.dot_dimension_numbers<[1], [0], [0], [1], [0, 0, 1, 1], [], []>} : vector<8x128xf32>, vector<128x128xf32>, vector<8x128xf32> -> vector<8x128xf32>
    %c0_9 = arith.constant 0 : index
    %c0_10 = arith.constant 0 : index
    %10 = vector.load %arg5[%c0_9, %c0_10] : memref<1x128xf32, #tpu.memory_space<vmem>>, vector<1x128xf32>
    %11 = vector.broadcast %10 : vector<1x128xf32> to vector<8x128xf32>
    %12 = arith.addf %9, %11 : vector<8x128xf32>
    %cst_11 = arith.constant 0.000000e+00 : f32
    %13 = vector.broadcast %cst_11 : f32 to vector<8x128xf32>
    %14 = arith.maximumf %12, %13 : vector<8x128xf32>
    %c0_12 = arith.constant 0 : index
    %c0_13 = arith.constant 0 : index
    %15 = vector.load %arg6[%c0_12, %c0_13] : memref<128x256xf32, #tpu.memory_space<vmem>>, vector<128x256xf32>
    %cst_14 = arith.constant dense<0.000000e+00> : vector<8x256xf32>
    %16 = tpu.matmul %14, %15, %cst_14 {dimension_numbers = #tpu.dot_dimension_numbers<[1], [0], [0], [1], [0, 0, 1, 1], [], []>} : vector<8x128xf32>, vector<128x256xf32>, vector<8x256xf32> -> vector<8x256xf32>
    %c0_15 = arith.constant 0 : index
    %c0_16 = arith.constant 0 : index
    %17 = vector.load %arg7[%c0_15, %c0_16] : memref<1x256xf32, #tpu.memory_space<vmem>>, vector<1x256xf32>
    %18 = vector.broadcast %17 : vector<1x256xf32> to vector<8x256xf32>
    %19 = arith.addf %16, %18 : vector<8x256xf32>
    %cst_17 = arith.constant 0.000000e+00 : f32
    %20 = vector.broadcast %cst_17 : f32 to vector<8x256xf32>
    %21 = arith.maximumf %19, %20 : vector<8x256xf32>
    %22 = vector.extract_strided_slice %21 {offsets = [0, 0], sizes = [8, 128], strides = [1, 1]} : vector<8x256xf32> to vector<8x128xf32>
    %23 = vector.extract_strided_slice %21 {offsets = [0, 128], sizes = [8, 128], strides = [1, 1]} : vector<8x256xf32> to vector<8x128xf32>
    %c0_18 = arith.constant 0 : index
    %c0_19 = arith.constant 0 : index
    %24 = vector.load %arg8[%c0_18, %c0_19] : memref<1x128xf32, #tpu.memory_space<vmem>>, vector<1x128xf32>
    %25 = vector.broadcast %24 : vector<1x128xf32> to vector<8x128xf32>
    %26 = arith.mulf %22, %25 : vector<8x128xf32>
    %cst_20 = arith.constant dense<0.000000e+00> : vector<8xf32>
    %27 = vector.multi_reduction <add>, %26, %cst_20 [1] : vector<8x128xf32> to vector<8xf32>
    %28 = vector.shape_cast %27 : vector<8xf32> to vector<8x1xf32>
    %c0_21 = arith.constant 0 : index
    %c0_22 = arith.constant 0 : index
    %29 = vector.load %arg9[%c0_21, %c0_22] : memref<1x1xf32, #tpu.memory_space<vmem>>, vector<1x1xf32>
    %30 = vector.broadcast %29 : vector<1x1xf32> to vector<8x1xf32>
    %31 = arith.addf %28, %30 : vector<8x1xf32>
    %c0_23 = arith.constant 0 : index
    %c0_24 = arith.constant 0 : index
    %32 = vector.load %arg10[%c0_23, %c0_24] : memref<128x128xf32, #tpu.memory_space<vmem>>, vector<128x128xf32>
    %cst_25 = arith.constant dense<0.000000e+00> : vector<8x128xf32>
    %33 = tpu.matmul %23, %32, %cst_25 {dimension_numbers = #tpu.dot_dimension_numbers<[1], [0], [0], [1], [0, 0, 1, 1], [], []>} : vector<8x128xf32>, vector<128x128xf32>, vector<8x128xf32> -> vector<8x128xf32>
    %c0_26 = arith.constant 0 : index
    %c0_27 = arith.constant 0 : index
    %34 = vector.load %arg11[%c0_26, %c0_27] : memref<1x128xf32, #tpu.memory_space<vmem>>, vector<1x128xf32>
    %35 = vector.broadcast %34 : vector<1x128xf32> to vector<8x128xf32>
    %36 = arith.addf %33, %35 : vector<8x128xf32>
    %37 = vector.broadcast %31 : vector<8x1xf32> to vector<8x128xf32>
    %38 = arith.addf %37, %36 : vector<8x128xf32>
    %c0_28 = arith.constant 0 : index
    %c0_29 = arith.constant 0 : index
    %39 = vector.load %arg12[%c0_28, %c0_29] : memref<8x128xf32, #tpu.memory_space<vmem>>, vector<8x128xf32>
    tpu.vector_store %arg12[%c0_28, %c0_29], %38 {strides = array<i32>} : memref<8x128xf32, #tpu.memory_space<vmem>>, vector<8x128xf32>,
    return
  }
  func.func @transform_0(%arg0: i32) -> (i32, i32) {
    %c0_i32 = arith.constant 0 : i32
    %c0_i32_0 = arith.constant 0 : i32
    return %arg0, %c0_i32 : i32, i32
  }
  func.func @transform_1(%arg0: i32) -> (i32, i32) {
    %c0_i32 = arith.constant 0 : i32
    %c0_i32_0 = arith.constant 0 : i32
    %c0_i32_1 = arith.constant 0 : i32
    return %c0_i32, %c0_i32_0 : i32, i32
  }
  func.func @transform_2(%arg0: i32) -> (i32, i32) {
    %c0_i32 = arith.constant 0 : i32
    %c0_i32_0 = arith.constant 0 : i32
    %c0_i32_1 = arith.constant 0 : i32
    return %c0_i32, %c0_i32_0 : i32, i32
  }
  func.func @transform_3(%arg0: i32) -> (i32, i32) {
    %c0_i32 = arith.constant 0 : i32
    %c0_i32_0 = arith.constant 0 : i32
    %c0_i32_1 = arith.constant 0 : i32
    return %c0_i32, %c0_i32_0 : i32, i32
  }
  func.func @transform_4(%arg0: i32) -> (i32, i32) {
    %c0_i32 = arith.constant 0 : i32
    %c0_i32_0 = arith.constant 0 : i32
    %c0_i32_1 = arith.constant 0 : i32
    return %c0_i32, %c0_i32_0 : i32, i32
  }
  func.func @transform_5(%arg0: i32) -> (i32, i32) {
    %c0_i32 = arith.constant 0 : i32
    %c0_i32_0 = arith.constant 0 : i32
    %c0_i32_1 = arith.constant 0 : i32
    return %c0_i32, %c0_i32_0 : i32, i32
  }
  func.func @transform_6(%arg0: i32) -> (i32, i32) {
    %c0_i32 = arith.constant 0 : i32
    %c0_i32_0 = arith.constant 0 : i32
    %c0_i32_1 = arith.constant 0 : i32
    return %c0_i32, %c0_i32_0 : i32, i32
  }
  func.func @transform_7(%arg0: i32) -> (i32, i32) {
    %c0_i32 = arith.constant 0 : i32
    %c0_i32_0 = arith.constant 0 : i32
    %c0_i32_1 = arith.constant 0 : i32
    return %c0_i32, %c0_i32_0 : i32, i32
  }
  func.func @transform_8(%arg0: i32) -> (i32, i32) {
    %c0_i32 = arith.constant 0 : i32
    %c0_i32_0 = arith.constant 0 : i32
    %c0_i32_1 = arith.constant 0 : i32
    return %c0_i32, %c0_i32_0 : i32, i32
  }
  func.func @transform_9(%arg0: i32) -> (i32, i32) {
    %c0_i32 = arith.constant 0 : i32
    %c0_i32_0 = arith.constant 0 : i32
    %c0_i32_1 = arith.constant 0 : i32
    return %c0_i32, %c0_i32_0 : i32, i32
  }
  func.func @transform_10(%arg0: i32) -> (i32, i32) {
    %c0_i32 = arith.constant 0 : i32
    %c0_i32_0 = arith.constant 0 : i32
    %c0_i32_1 = arith.constant 0 : i32
    return %c0_i32, %c0_i32_0 : i32, i32
  }
  func.func @transform_11(%arg0: i32) -> (i32, i32) {
    %c0_i32 = arith.constant 0 : i32
    %c0_i32_0 = arith.constant 0 : i32
    return %arg0, %c0_i32 : i32, i32
  }
}

module attributes {stable_mosaic.version = 11 : i64} {
  func.func @qnet_twin_duel_kernel(%arg0: i32, %arg1: memref<8x128xf32, #tpu.memory_space<vmem>>, %arg2: memref<128x128xf32, #tpu.memory_space<vmem>>, %arg3: memref<1x128xf32, #tpu.memory_space<vmem>>, %arg4: memref<128x128xf32, #tpu.memory_space<vmem>>, %arg5: memref<1x128xf32, #tpu.memory_space<vmem>>, %arg6: memref<128x256xf32, #tpu.memory_space<vmem>>, %arg7: memref<1x256xf32, #tpu.memory_space<vmem>>, %arg8: memref<1x128xf32, #tpu.memory_space<vmem>>, %arg9: memref<1x1xf32, #tpu.memory_space<vmem>>, %arg10: memref<128x128xf32, #tpu.memory_space<vmem>>, %arg11: memref<1x128xf32, #tpu.memory_space<vmem>>, %arg12: memref<8x128xf32, #tpu.memory_space<vmem>>) attributes {dimension_semantics = [#tpu.dimension_semantics<parallel>], iteration_bounds = array<i64: 1>, scalar_prefetch = 0 : i64, scratch_operands = 0 : i64, tpu.core_type = #tpu.core_type<tc>, window_params = [{transform_indices = @transform_0, window_bounds = array<i64: 8, 128>}, {pipeline_mode = #tpu.pipeline_mode<synchronous>, transform_indices = @transform_1, window_bounds = array<i64: 128, 128>}, {pipeline_mode = #tpu.pipeline_mode<synchronous>, transform_indices = @transform_2, window_bounds = array<i64: 1, 128>}, {pipeline_mode = #tpu.pipeline_mode<synchronous>, transform_indices = @transform_3, window_bounds = array<i64: 128, 128>}, {pipeline_mode = #tpu.pipeline_mode<synchronous>, transform_indices = @transform_4, window_bounds = array<i64: 1, 128>}, {pipeline_mode = #tpu.pipeline_mode<synchronous>, transform_indices = @transform_5, window_bounds = array<i64: 128, 256>}, {pipeline_mode = #tpu.pipeline_mode<synchronous>, transform_indices = @transform_6, window_bounds = array<i64: 1, 256>}, {pipeline_mode = #tpu.pipeline_mode<synchronous>, transform_indices = @transform_7, window_bounds = array<i64: 1, 128>}, {pipeline_mode = #tpu.pipeline_mode<synchronous>, transform_indices = @transform_8, window_bounds = array<i64: 1, 1>}, {pipeline_mode = #tpu.pipeline_mode<synchronous>, transform_indices = @transform_9, window_bounds = array<i64: 128, 128>}, {pipeline_mode = #tpu.pipeline_mode<synchronous>, transform_indices = @transform_10, window_bounds = array<i64: 1, 128>}, {transform_indices = @transform_11, window_bounds = array<i64: 8, 128>}]} {
    %c0 = arith.constant 0 : index
    %c0_0 = arith.constant 0 : index
    %0 = vector.load %arg1[%c0, %c0_0] : memref<8x128xf32, #tpu.memory_space<vmem>>, vector<8x128xf32>
    %c0_1 = arith.constant 0 : index
    %c0_2 = arith.constant 0 : index
    %1 = vector.load %arg2[%c0_1, %c0_2] : memref<128x128xf32, #tpu.memory_space<vmem>>, vector<128x128xf32>
    %cst = arith.constant dense<0.000000e+00> : vector<8x128xf32>
    %2 = tpu.matmul %0, %1, %cst {dimension_numbers = #tpu.dot_dimension_numbers<[1], [0], [0], [1], [0, 0, 1, 1], [], []>} : vector<8x128xf32>, vector<128x128xf32>, vector<8x128xf32> -> vector<8x128xf32>
    %c0_3 = arith.constant 0 : index
    %c0_4 = arith.constant 0 : index
    %3 = vector.load %arg3[%c0_3, %c0_4] : memref<1x128xf32, #tpu.memory_space<vmem>>, vector<1x128xf32>
    %4 = vector.broadcast %3 : vector<1x128xf32> to vector<8x128xf32>
    %5 = arith.addf %2, %4 : vector<8x128xf32>
    %cst_5 = arith.constant 0.000000e+00 : f32
    %6 = vector.broadcast %cst_5 : f32 to vector<8x128xf32>
    %7 = arith.maximumf %5, %6 : vector<8x128xf32>
    %c0_6 = arith.constant 0 : index
    %c0_7 = arith.constant 0 : index
    %8 = vector.load %arg4[%c0_6, %c0_7] : memref<128x128xf32, #tpu.memory_space<vmem>>, vector<128x128xf32>
    %cst_8 = arith.constant dense<0.000000e+00> : vector<8x128xf32>
    %9 = tpu.matmul %7, %8, %cst_8 {dimension_numbers = #tpu.dot_dimension_numbers<[1], [0], [0], [1], [0, 0, 1, 1], [], []>} : vector<8x128xf32>, vector<128x128xf32>, vector<8x128xf32> -> vector<8x128xf32>
    %c0_9 = arith.constant 0 : index
    %c0_10 = arith.constant 0 : index
    %10 = vector.load %arg5[%c0_9, %c0_10] : memref<1x128xf32, #tpu.memory_space<vmem>>, vector<1x128xf32>
    %11 = vector.broadcast %10 : vector<1x128xf32> to vector<8x128xf32>
    %12 = arith.addf %9, %11 : vector<8x128xf32>
    %cst_11 = arith.constant 0.000000e+00 : f32
    %13 = vector.broadcast %cst_11 : f32 to vector<8x128xf32>
    %14 = arith.maximumf %12, %13 : vector<8x128xf32>
    %c0_12 = arith.constant 0 : index
    %c0_13 = arith.constant 0 : index
    %15 = vector.load %arg6[%c0_12, %c0_13] : memref<128x256xf32, #tpu.memory_space<vmem>>, vector<128x256xf32>
    %cst_14 = arith.constant dense<0.000000e+00> : vector<8x256xf32>
    %16 = tpu.matmul %14, %15, %cst_14 {dimension_numbers = #tpu.dot_dimension_numbers<[1], [0], [0], [1], [0, 0, 1, 1], [], []>} : vector<8x128xf32>, vector<128x256xf32>, vector<8x256xf32> -> vector<8x256xf32>
    %c0_15 = arith.constant 0 : index
    %c0_16 = arith.constant 0 : index
    %17 = vector.load %arg7[%c0_15, %c0_16] : memref<1x256xf32, #tpu.memory_space<vmem>>, vector<1x256xf32>
    %18 = vector.broadcast %17 : vector<1x256xf32> to vector<8x256xf32>
    %19 = arith.addf %16, %18 : vector<8x256xf32>
    %cst_17 = arith.constant 0.000000e+00 : f32
    %20 = vector.broadcast %cst_17 : f32 to vector<8x256xf32>
    %21 = arith.maximumf %19, %20 : vector<8x256xf32>
    %22 = vector.extract_strided_slice %21 {offsets = [0, 0], sizes = [8, 128], strides = [1, 1]} : vector<8x256xf32> to vector<8x128xf32>
    %23 = vector.extract_strided_slice %21 {offsets = [0, 128], sizes = [8, 128], strides = [1, 1]} : vector<8x256xf32> to vector<8x128xf32>
    %c0_18 = arith.constant 0 : index
    %c0_19 = arith.constant 0 : index
    %24 = vector.load %arg8[%c0_18, %c0_19] : memref<1x128xf32, #tpu.memory_space<vmem>>, vector<1x128xf32>
    %25 = vector.broadcast %24 : vector<1x128xf32> to vector<8x128xf32>
    %26 = arith.mulf %22, %25 : vector<8x128xf32>
    %cst_20 = arith.constant dense<0.000000e+00> : vector<8xf32>
    %27 = vector.multi_reduction <add>, %26, %cst_20 [1] : vector<8x128xf32> to vector<8xf32>
    %28 = vector.shape_cast %27 : vector<8xf32> to vector<8x1xf32>
    %c0_21 = arith.constant 0 : index
    %c0_22 = arith.constant 0 : index
    %29 = vector.load %arg9[%c0_21, %c0_22] : memref<1x1xf32, #tpu.memory_space<vmem>>, vector<1x1xf32>
    %30 = vector.broadcast %29 : vector<1x1xf32> to vector<8x1xf32>
    %31 = arith.addf %28, %30 : vector<8x1xf32>
    %c0_23 = arith.constant 0 : index
    %c0_24 = arith.constant 0 : index
    %32 = vector.load %arg10[%c0_23, %c0_24] : memref<128x128xf32, #tpu.memory_space<vmem>>, vector<128x128xf32>
    %cst_25 = arith.constant dense<0.000000e+00> : vector<8x128xf32>
    %33 = tpu.matmul %23, %32, %cst_25 {dimension_numbers = #tpu.dot_dimension_numbers<[1], [0], [0], [1], [0, 0, 1, 1], [], []>} : vector<8x128xf32>, vector<128x128xf32>, vector<8x128xf32> -> vector<8x128xf32>
    %c0_26 = arith.constant 0 : index
    %c0_27 = arith.constant 0 : index
    %34 = vector.load %arg11[%c0_26, %c0_27] : memref<1x128xf32, #tpu.memory_space<vmem>>, vector<1x128xf32>
    %35 = vector.broadcast %34 : vector<1x128xf32> to vector<8x128xf32>
    %36 = arith.addf %33, %35 : vector<8x128xf32>
    %37 = vector.broadcast %31 : vector<8x1xf32> to vector<8x128xf32>
    %38 = arith.addf %37, %36 : vector<8x128xf32>
    %c0_28 = arith.constant 0 : index
    %c0_29 = arith.constant 0 : index
    %39 = vector.load %arg12[%c0_28, %c0_29] : memref<8x128xf32, #tpu.memory_space<vmem>>, vector<8x128xf32>
    tpu.vector_store %arg12[%c0_28, %c0_29], %38 {strides = array<i32>} : memref<8x128xf32, #tpu.memory_space<vmem>>, vector<8x128xf32>,
    return
  }
  func.func @transform_0(%arg0: i32) -> (i32, i32) {
    %c0_i32 = arith.constant 0 : i32
    %c0_i32_0 = arith.constant 0 : i32
    return %arg0, %c0_i32 : i32, i32
  }
  func.func @transform_1(%arg0: i32) -> (i32, i32) {
    %c0_i32 = arith.constant 0 : i32
    %c0_i32_0 = arith.constant 0 : i32
    %c0_i32_1 = arith.constant 0 : i32
    return %c0_i32, %c0_i32_0 : i32, i32
  }
  func.func @transform_2(%arg0: i32) -> (i32, i32) {
    %c0_i32 = arith.constant 0 : i32
    %c0_i32_0 = arith.constant 0 : i32
    %c0_i32_1 = arith.constant 0 : i32
    return %c0_i32, %c0_i32_0 : i32, i32
  }
  func.func @transform_3(%arg0: i32) -> (i32, i32) {
    %c0_i32 = arith.constant 0 : i32
    %c0_i32_0 = arith.constant 0 : i32
    %c0_i32_1 = arith.constant 0 : i32
    return %c0_i32, %c0_i32_0 : i32, i32
  }
  func.func @transform_4(%arg0: i32) -> (i32, i32) {
    %c0_i32 = arith.constant 0 : i32
    %c0_i32_0 = arith.constant 0 : i32
    %c0_i32_1 = arith.constant 0 : i32
    return %c0_i32, %c0_i32_0 : i32, i32
  }
  func.func @transform_5(%arg0: i32) -> (i32, i32) {
    %c0_i32 = arith.constant 0 : i32
    %c0_i32_0 = arith.constant 0 : i32
    %c0_i32_1 = arith.constant 0 : i32
    return %c0_i32, %c0_i32_0 : i32, i32
  }
  func.func @transform_6(%arg0: i32) -> (i32, i32) {
    %c0_i32 = arith.constant 0 : i32
    %c0_i32_0 = arith.constant 0 : i32
    %c0_i32_1 = arith.constant 0 : i32
    return %c0_i32, %c0_i32_0 : i32, i32
  }
  func.func @transform_7(%arg0: i32) -> (i32, i32) {
    %c0_i32 = arith.constant 0 : i32
    %c0_i32_0 = arith.constant 0 : i32
    %c0_i32_1 = arith.constant 0 : i32
    return %c0_i32, %c0_i32_0 : i32, i32
  }
  func.func @transform_8(%arg0: i32) -> (i32, i32) {
    %c0_i32 = arith.constant 0 : i32
    %c0_i32_0 = arith.constant 0 : i32
    %c0_i32_1 = arith.constant 0 : i32
    return %c0_i32, %c0_i32_0 : i32, i32
  }
  func.func @transform_9(%arg0: i32) -> (i32, i32) {
    %c0_i32 = arith.constant 0 : i32
    %c0_i32_0 = arith.constant 0 : i32
    %c0_i32_1 = arith.constant 0 : i32
    return %c0_i32, %c0_i32_0 : i32, i32
  }
  func.func @transform_10(%arg0: i32) -> (i32, i32) {
    %c0_i32 = arith.constant 0 : i32
    %c0_i32_0 = arith.constant 0 : i32
    %c0_i32_1 = arith.constant 0 : i32
    return %c0_i32, %c0_i32_0 : i32, i32
  }
  func.func @transform_11(%arg0: i32) -> (i32, i32) {
    %c0_i32 = arith.constant 0 : i32
    %c0_i32_0 = arith.constant 0 : i32
    return %arg0, %c0_i32 : i32, i32
  }
}

</mosaic_0001>

<llo_original>
// kernel: tpu_custom_call.1
$region0: #{tpu_custom_call.1}
  #allocation0 [shape = 'u32[]', space=smem, size = 0x4, offset = 0x4, fixed_abs, tag = 'smem constant byte address 0x4 - core index']
  #allocation1 [shape = 'u32[144,128]{1,0:T(1,128)}', space=vmem, size = 0x12000, scoped, tag = 'internal scratch']
  #allocation2 [shape = 'f32[1,1]{1,0:T(1,128)S(1)}', space=vmem, size = 0x200, scoped, tag = 'scoped memory for tpu_custom_call.1']
  %s0 = inlined_call_operand.hbm [shape: f32[8,128], index: 0, kind: input, shape index: {}]
  %s1 = inlined_call_operand.hbm [shape: f32[128,128], index: 1, kind: input, shape index: {}]
  %s2 = inlined_call_operand.vmem [shape: f32[1,128], index: 2, kind: input, shape index: {}]
  %s3 = inlined_call_operand.hbm [shape: f32[128,128], index: 3, kind: input, shape index: {}]
  %s4 = inlined_call_operand.vmem [shape: f32[1,128], index: 4, kind: input, shape index: {}]
  %s5 = inlined_call_operand.hbm [shape: f32[128,256], index: 5, kind: input, shape index: {}]
  %s6 = inlined_call_operand.vmem [shape: f32[1,256], index: 6, kind: input, shape index: {}]
  %s7 = inlined_call_operand.vmem [shape: f32[1,128], index: 7, kind: input, shape index: {}]
  %s8 = inlined_call_operand.<no memory space> [shape: f32[1,1], index: 8, kind: input, shape index: {}]
  %s9 = inlined_call_operand.hbm [shape: f32[128,128], index: 9, kind: input, shape index: {}]
  %s10 = inlined_call_operand.vmem [shape: f32[1,128], index: 10, kind: input, shape index: {}]
  %s11 = inlined_call_operand.hbm [shape: f32[8,128], index: 11, kind: output, shape index: {}]
  %s12 = sld [smem:[#allocation0]]
  $region74: #{tpu_custom_call.1} parent=0
    _
  %s14 = ssub.s32 1, %s12
  %s15 = scalar_select 0, %s14, %s12
  %v16 = vstv %s8
  %17 = vst [vmem:[#allocation2] sm:$0x1] %v16
  $region1: #{tpu_custom_call.1} parent=0
    #allocation3 [shape = 'u8[4096]{0}', space=vmem, size = 0x1000, scoped, tag = 'input window, operand 0, single buffered']
    #allocation4 [shape = 's32[1]{0}', space=sflag, size = 0x4, scoped, tag = 'scoped memory for tpu_custom_call.1']
    #allocation5 [shape = 's32[1]{0}', space=sflag, size = 0x4, scoped, tag = 'scoped memory for tpu_custom_call.1']
    #allocation6 [shape = 'u8[65536]{0}', space=vmem, size = 0x10000, scoped, tag = 'input window, operand 1, single buffered']
    #allocation7 [shape = 's32[1]{0}', space=sflag, size = 0x4, scoped, tag = 'scoped memory for tpu_custom_call.1']
    #allocation8 [shape = 'u8[65536]{0}', space=vmem, size = 0x10000, scoped, tag = 'input window, operand 3, single buffered']
    #allocation9 [shape = 'u8[131072]{0}', space=vmem, size = 0x20000, scoped, tag = 'input window, operand 5, single buffered']
    #allocation10 [shape = 's32[1]{0}', space=sflag, size = 0x4, scoped, tag = 'scoped memory for tpu_custom_call.1']
    #allocation11 [shape = 'u8[65536]{0}', space=vmem, size = 0x10000, scoped, tag = 'input window, operand 9, single buffered']
    #allocation12 [shape = 'u8[4096]{0}', space=vmem, size = 0x1000, scoped, tag = 'output window, operand 0, single buffered']
    %18 = vsyncpa [#allocation4], 0
    %19 = vsyncpa [#allocation7], 0
    %20 = vsyncpa [#allocation10], 0
    %21 = vsyncpa [#allocation5], 0
    // Predicated region
    $region2: #{tpu_custom_call.1} parent=1 // pred_check
      _
    $region3: #{tpu_custom_call.1} parent=1 // pred_check_branch
      %23 = sbr.rel (0) target = $region5
    $region4: #{tpu_custom_call.1} parent=1 // pred_region
      %s25 = ssub.s32 128, 128
      %26 = vsyncadd [#allocation4], %s25
      %s28 = sshll.u32 [#allocation3], 4
      %s29 = int_to_ptr.vmem [resolvable:$true] %s28
      %31 = dma.hbm_to_vmem [thread:$0]  %s0, 128, %s29, [#allocation4]
    $region5: #{tpu_custom_call.1} parent=1 // pred_fallthru
      _
    // Predicated region
    $region6: #{tpu_custom_call.1} parent=1 // pred_check
      _
    $region7: #{tpu_custom_call.1} parent=1 // pred_check_branch
      %33 = sbr.rel (0) target = $region9
    $region8: #{tpu_custom_call.1} parent=1 // pred_region
      %s35 = ssub.s32 2048, 2048
      %36 = vsyncadd [#allocation7], %s35
      %s37 = sshll.u32 [#allocation6], 4
      %s38 = int_to_ptr.vmem [resolvable:$true] %s37
      %43 = dma.hbm_to_vmem [thread:$0]  %s1, 2048, %s38, [#allocation7], 128, 128, 8
    $region9: #{tpu_custom_call.1} parent=1 // pred_fallthru
      _
    // Predicated region
    $region10: #{tpu_custom_call.1} parent=1 // pred_check
      _
    $region11: #{tpu_custom_call.1} parent=1 // pred_check_branch
      %45 = sbr.rel (0) target = $region13
    $region12: #{tpu_custom_call.1} parent=1 // pred_region
      _
    $region13: #{tpu_custom_call.1} parent=1 // pred_fallthru
      _
    // Predicated region
    $region14: #{tpu_custom_call.1} parent=1 // pred_check
      _
    $region15: #{tpu_custom_call.1} parent=1 // pred_check_branch
      %47 = sbr.rel (0) target = $region17
    $region16: #{tpu_custom_call.1} parent=1 // pred_region
      %s49 = ssub.s32 2048, 2048
      %50 = vsyncadd [#allocation7], %s49
      %s51 = sshll.u32 [#allocation8], 4
      %s52 = int_to_ptr.vmem [resolvable:$true] %s51
      %57 = dma.hbm_to_vmem [thread:$0]  %s3, 2048, %s52, [#allocation7], 128, 128, 8
    $region17: #{tpu_custom_call.1} parent=1 // pred_fallthru
      _
    // Predicated region
    $region18: #{tpu_custom_call.1} parent=1 // pred_check
      _
    $region19: #{tpu_custom_call.1} parent=1 // pred_check_branch
      %59 = sbr.rel (0) target = $region21
    $region20: #{tpu_custom_call.1} parent=1 // pred_region
      _
    $region21: #{tpu_custom_call.1} parent=1 // pred_fallthru
      _
    // Predicated region
    $region22: #{tpu_custom_call.1} parent=1 // pred_check
      _
    $region23: #{tpu_custom_call.1} parent=1 // pred_check_branch
      %61 = sbr.rel (0) target = $region25
    $region24: #{tpu_custom_call.1} parent=1 // pred_region
      %s63 = ssub.s32 4096, 4096
      %64 = vsyncadd [#allocation10], %s63
      %s65 = sshll.u32 [#allocation9], 4
      %s66 = int_to_ptr.vmem [resolvable:$true] %s65
      %71 = dma.hbm_to_vmem [thread:$0]  %s5, 4096, %s66, [#allocation10], 256, 256, 16
    $region25: #{tpu_custom_call.1} parent=1 // pred_fallthru
      _
    // Predicated region
    $region26: #{tpu_custom_call.1} parent=1 // pred_check
      _
    $region27: #{tpu_custom_call.1} parent=1 // pred_check_branch
      %73 = sbr.rel (0) target = $region29
    $region28: #{tpu_custom_call.1} parent=1 // pred_region
      _
    $region29: #{tpu_custom_call.1} parent=1 // pred_fallthru
      _
    // Predicated region
    $region30: #{tpu_custom_call.1} parent=1 // pred_check
      _
    $region31: #{tpu_custom_call.1} parent=1 // pred_check_branch
      %75 = sbr.rel (0) target = $region33
    $region32: #{tpu_custom_call.1} parent=1 // pred_region
      _
    $region33: #{tpu_custom_call.1} parent=1 // pred_fallthru
      _
    // Predicated region
    $region34: #{tpu_custom_call.1} parent=1 // pred_check
      _
    $region35: #{tpu_custom_call.1} parent=1 // pred_check_branch
      %77 = sbr.rel (0) target = $region37
    $region36: #{tpu_custom_call.1} parent=1 // pred_region
      _
    $region37: #{tpu_custom_call.1} parent=1 // pred_fallthru
      _
    // Predicated region
    $region38: #{tpu_custom_call.1} parent=1 // pred_check
      _
    $region39: #{tpu_custom_call.1} parent=1 // pred_check_branch
      %79 = sbr.rel (0) target = $region41
    $region40: #{tpu_custom_call.1} parent=1 // pred_region
      %s81 = ssub.s32 2048, 2048
      %82 = vsyncadd [#allocation10], %s81
      %s83 = sshll.u32 [#allocation11], 4
      %s84 = int_to_ptr.vmem [resolvable:$true] %s83
      %89 = dma.hbm_to_vmem [thread:$0]  %s9, 2048, %s84, [#allocation10], 128, 128, 8
    $region41: #{tpu_custom_call.1} parent=1 // pred_fallthru
      _
    // Predicated region
    $region42: #{tpu_custom_call.1} parent=1 // pred_check
      _
    $region43: #{tpu_custom_call.1} parent=1 // pred_check_branch
      %91 = sbr.rel (0) target = $region45
    $region44: #{tpu_custom_call.1} parent=1 // pred_region
      _
    $region45: #{tpu_custom_call.1} parent=1 // pred_fallthru
      _
    // Predicated region
    $region46: #{tpu_custom_call.1} parent=1 // pred_check
      _
    $region47: #{tpu_custom_call.1} parent=1 // pred_check_branch
      %93 = sbr.rel (0) target = $region49
    $region48: #{tpu_custom_call.1} parent=1 // pred_region
      %94 = dma.done [#allocation4], 128
    $region49: #{tpu_custom_call.1} parent=1 // pred_fallthru
      _
    // Predicated region
    $region50: #{tpu_custom_call.1} parent=1 // pred_check
      _
    $region51: #{tpu_custom_call.1} parent=1 // pred_check_branch
      %96 = sbr.rel (0) target = $region53
    $region52: #{tpu_custom_call.1} parent=1 // pred_region
      %97 = dma.done [#allocation7], 2048
    $region53: #{tpu_custom_call.1} parent=1 // pred_fallthru
      _
    // Predicated region
    $region54: #{tpu_custom_call.1} parent=1 // pred_check
      _
    $region55: #{tpu_custom_call.1} parent=1 // pred_check_branch
      %99 = sbr.rel (0) target = $region57
    $region56: #{tpu_custom_call.1} parent=1 // pred_region
      %100 = dma.done [#allocation7], 2048
    $region57: #{tpu_custom_call.1} parent=1 // pred_fallthru
      _
    // Predicated region
    $region58: #{tpu_custom_call.1} parent=1 // pred_check
      _
    $region59: #{tpu_custom_call.1} parent=1 // pred_check_branch
      %102 = sbr.rel (0) target = $region61
    $region60: #{tpu_custom_call.1} parent=1 // pred_region
      %103 = dma.done [#allocation10], 4096
    $region61: #{tpu_custom_call.1} parent=1 // pred_fallthru
      _
    // Predicated region
    $region62: #{tpu_custom_call.1} parent=1 // pred_check
      _
    $region63: #{tpu_custom_call.1} parent=1 // pred_check_branch
      %105 = sbr.rel (0) target = $region65
    $region64: #{tpu_custom_call.1} parent=1 // pred_region
      %106 = dma.done [#allocation10], 2048
    $region65: #{tpu_custom_call.1} parent=1 // pred_fallthru
      _
    %v107 = vld [vmem:[#allocation3] sm:$0xff]
    %v108 = vld [vmem:[#allocation6] sm:$0xff]
    %v109 = vld [vmem:[#allocation6 + $0x8] sm:$0xff]
    %v110 = vld [vmem:[#allocation6 + $0x10] sm:$0xff]
    %v111 = vld [vmem:[#allocation6 + $0x18] sm:$0xff]
    %v112 = vld [vmem:[#allocation6 + $0x20] sm:$0xff]
    %v113 = vld [vmem:[#allocation6 + $0x28] sm:$0xff]
    %v114 = vld [vmem:[#allocation6 + $0x30] sm:$0xff]
    %v115 = vld [vmem:[#allocation6 + $0x38] sm:$0xff]
    %v116 = vld [vmem:[#allocation6 + $0x40] sm:$0xff]
    %v117 = vld [vmem:[#allocation6 + $0x48] sm:$0xff]
    %v118 = vld [vmem:[#allocation6 + $0x50] sm:$0xff]
    %v119 = vld [vmem:[#allocation6 + $0x58] sm:$0xff]
    %v120 = vld [vmem:[#allocation6 + $0x60] sm:$0xff]
    %v121 = vld [vmem:[#allocation6 + $0x68] sm:$0xff]
    %v122 = vld [vmem:[#allocation6 + $0x70] sm:$0xff]
    %v123 = vld [vmem:[#allocation6 + $0x78] sm:$0xff]
    %v124 = vld [vmem:[%s2] sm:$0x1]
    %v126 = vlaneseq
    %v127 = vshrl.u32 %v126, 7
    %v128 = vsub.s32 0, %v127
    %v129 = vrot.slane %v124, %v128
    %131 = vmatprep.subr.mxu0 0.0
    %132 = vmatpush1.msra.mxu0 %v108
    %133 = vmatprep.subr.mxu0 0.0
    %134 = vmatpush1.msra.mxu0 %v109
    %135 = vmatprep.subr.mxu0 0.0
    %136 = vmatpush1.msra.mxu0 %v110
    %137 = vmatprep.subr.mxu0 0.0
    %138 = vmatpush1.msra.mxu0 %v111
    %139 = vmatprep.subr.mxu0 0.0
    %140 = vmatpush1.msra.mxu0 %v112
    %141 = vmatprep.subr.mxu0 0.0
    %142 = vmatpush1.msra.mxu0 %v113
    %143 = vmatprep.subr.mxu0 0.0
    %144 = vmatpush1.msra.mxu0 %v114
    %145 = vmatprep.subr.mxu0 0.0
    %146 = vmatpush1.msra.mxu0 %v115
    %147 = vmatprep.subr.mxu0 0.0
    %148 = vmatpush1.msra.mxu0 %v116
    %149 = vmatprep.subr.mxu0 0.0
    %150 = vmatpush1.msra.mxu0 %v117
    %151 = vmatprep.subr.mxu0 0.0
    %152 = vmatpush1.msra.mxu0 %v118
    %153 = vmatprep.subr.mxu0 0.0
    %154 = vmatpush1.msra.mxu0 %v119
    %155 = vmatprep.subr.mxu0 0.0
    %156 = vmatpush1.msra.mxu0 %v120
    %157 = vmatprep.subr.mxu0 0.0
    %158 = vmatpush1.msra.mxu0 %v121
    %159 = vmatprep.subr.mxu0 0.0
    %160 = vmatpush1.msra.mxu0 %v122
    %161 = vmatprep.subr.mxu0 0.0
    %162 = vmatpush1.msra.mxu0 %v123
    %163 = vmatprep.subr.mxu0 0.0
    %164 = vmatpush1.msra.mxu0 0.0
    %165 = vmatprep.subr.mxu0 0.0
    %166 = vmatpush1.msra.mxu0 0.0
    %167 = vmatprep.subr.mxu0 0.0
    %168 = vmatpush1.msra.mxu0 0.0
    %169 = vmatprep.subr.mxu0 0.0
    %170 = vmatpush1.msra.mxu0 0.0
    %171 = vmatprep.subr.mxu0 0.0
    %172 = vmatpush1.msra.mxu0 0.0
    %173 = vmatprep.subr.mxu0 0.0
    %174 = vmatpush1.msra.mxu0 0.0
    %175 = vmatprep.subr.mxu0 0.0
    %176 = vmatpush1.msra.mxu0 0.0
    %177 = vmatprep.subr.mxu0 0.0
    %178 = vmatpush1.msra.mxu0 0.0
    %179 = vmatprep.subr.mxu0 0.0
    %180 = vmatpush1.msra.mxu0 0.0
    %181 = vmatprep.subr.mxu0 0.0
    %182 = vmatpush1.msra.mxu0 0.0
    %183 = vmatprep.subr.mxu0 0.0
    %184 = vmatpush1.msra.mxu0 0.0
    %185 = vmatprep.subr.mxu0 0.0
    %186 = vmatpush1.msra.mxu0 0.0
    %187 = vmatprep.subr.mxu0 0.0
    %188 = vmatpush1.msra.mxu0 0.0
    %189 = vmatprep.subr.mxu0 0.0
    %190 = vmatpush1.msra.mxu0 0.0
    %191 = vmatprep.subr.mxu0 0.0
    %192 = vmatpush1.msra.mxu0 0.0
    %193 = vmatprep.subr.mxu0 0.0
    %194 = vmatpush1.msra.mxu0 0.0
    %195 = vmatprep.mubr.f32.mxu0 0.0
    %196 = vmatmul.mubr.f32.gmra.mrb[0].mxu0 %v107
    %v197 = vpop.f32.mrb[0].mxu0
    %v198 = vadd.f32 %v129, %v197
    %v199 = vpop.f32.mrb[0].mxu0
    %200 = vdwg.mxu0
    %v201 = vmax.f32 %v198, 0.0
    %v202 = vld [vmem:[#allocation8] sm:$0xff]
    %v203 = vld [vmem:[#allocation8 + $0x8] sm:$0xff]
    %v204 = vld [vmem:[#allocation8 + $0x10] sm:$0xff]
    %v205 = vld [vmem:[#allocation8 + $0x18] sm:$0xff]
    %v206 = vld [vmem:[#allocation8 + $0x20] sm:$0xff]
    %v207 = vld [vmem:[#allocation8 + $0x28] sm:$0xff]
    %v208 = vld [vmem:[#allocation8 + $0x30] sm:$0xff]
    %v209 = vld [vmem:[#allocation8 + $0x38] sm:$0xff]
    %v210 = vld [vmem:[#allocation8 + $0x40] sm:$0xff]
    %v211 = vld [vmem:[#allocation8 + $0x48] sm:$0xff]
    %v212 = vld [vmem:[#allocation8 + $0x50] sm:$0xff]
    %v213 = vld [vmem:[#allocation8 + $0x58] sm:$0xff]
    %v214 = vld [vmem:[#allocation8 + $0x60] sm:$0xff]
    %v215 = vld [vmem:[#allocation8 + $0x68] sm:$0xff]
    %v216 = vld [vmem:[#allocation8 + $0x70] sm:$0xff]
    %v217 = vld [vmem:[#allocation8 + $0x78] sm:$0xff]
    %v218 = vld [vmem:[%s4] sm:$0x1]
    %v220 = vlaneseq
    %v221 = vshrl.u32 %v220, 7
    %v222 = vsub.s32 0, %v221
    %v223 = vrot.slane %v218, %v222
    %225 = vmatprep.subr.mxu0 0.0
    %226 = vmatpush1.msra.mxu0 %v202
    %227 = vmatprep.subr.mxu0 0.0
    %228 = vmatpush1.msra.mxu0 %v203
    %229 = vmatprep.subr.mxu0 0.0
    %230 = vmatpush1.msra.mxu0 %v204
    %231 = vmatprep.subr.mxu0 0.0
    %232 = vmatpush1.msra.mxu0 %v205
    %233 = vmatprep.subr.mxu0 0.0
    %234 = vmatpush1.msra.mxu0 %v206
    %235 = vmatprep.subr.mxu0 0.0
    %236 = vmatpush1.msra.mxu0 %v207
    %237 = vmatprep.subr.mxu0 0.0
    %238 = vmatpush1.msra.mxu0 %v208
    %239 = vmatprep.subr.mxu0 0.0
    %240 = vmatpush1.msra.mxu0 %v209
    %241 = vmatprep.subr.mxu0 0.0
    %242 = vmatpush1.msra.mxu0 %v210
    %243 = vmatprep.subr.mxu0 0.0
    %244 = vmatpush1.msra.mxu0 %v211
    %245 = vmatprep.subr.mxu0 0.0
    %246 = vmatpush1.msra.mxu0 %v212
    %247 = vmatprep.subr.mxu0 0.0
    %248 = vmatpush1.msra.mxu0 %v213
    %249 = vmatprep.subr.mxu0 0.0
    %250 = vmatpush1.msra.mxu0 %v214
    %251 = vmatprep.subr.mxu0 0.0
    %252 = vmatpush1.msra.mxu0 %v215
    %253 = vmatprep.subr.mxu0 0.0
    %254 = vmatpush1.msra.mxu0 %v216
    %255 = vmatprep.subr.mxu0 0.0
    %256 = vmatpush1.msra.mxu0 %v217
    %257 = vmatprep.subr.mxu0 0.0
    %258 = vmatpush1.msra.mxu0 0.0
    %259 = vmatprep.subr.mxu0 0.0
    %260 = vmatpush1.msra.mxu0 0.0
    %261 = vmatprep.subr.mxu0 0.0
    %262 = vmatpush1.msra.mxu0 0.0
    %263 = vmatprep.subr.mxu0 0.0
    %264 = vmatpush1.msra.mxu0 0.0
    %265 = vmatprep.subr.mxu0 0.0
    %266 = vmatpush1.msra.mxu0 0.0
    %267 = vmatprep.subr.mxu0 0.0
    %268 = vmatpush1.msra.mxu0 0.0
    %269 = vmatprep.subr.mxu0 0.0
    %270 = vmatpush1.msra.mxu0 0.0
    %271 = vmatprep.subr.mxu0 0.0
    %272 = vmatpush1.msra.mxu0 0.0
    %273 = vmatprep.subr.mxu0 0.0
    %274 = vmatpush1.msra.mxu0 0.0
    %275 = vmatprep.subr.mxu0 0.0
    %276 = vmatpush1.msra.mxu0 0.0
    %277 = vmatprep.subr.mxu0 0.0
    %278 = vmatpush1.msra.mxu0 0.0
    %279 = vmatprep.subr.mxu0 0.0
    %280 = vmatpush1.msra.mxu0 0.0
    %281 = vmatprep.subr.mxu0 0.0
    %282 = vmatpush1.msra.mxu0 0.0
    %283 = vmatprep.subr.mxu0 0.0
    %284 = vmatpush1.msra.mxu0 0.0
    %285 = vmatprep.subr.mxu0 0.0
    %286 = vmatpush1.msra.mxu0 0.0
    %287 = vmatprep.subr.mxu0 0.0
    %288 = vmatpush1.msra.mxu0 0.0
    %289 = vmatprep.mubr.f32.mxu0 0.0
    %290 = vmatmul.mubr.f32.gmra.mrb[0].mxu0 %v201
    %v291 = vpop.f32.mrb[0].mxu0
    %v292 = vadd.f32 %v223, %v291
    %v293 = vpop.f32.mrb[0].mxu0
    %294 = vdwg.mxu0
    %v295 = vmax.f32 %v292, 0.0
    %v296 = vld [vmem:[#allocation9] sm:$0xff]
    %v297 = vld [vmem:[#allocation9 + $0x8] sm:$0xff]
    %v298 = vld [vmem:[#allocation9 + $0x10] sm:$0xff]
    %v299 = vld [vmem:[#allocation9 + $0x18] sm:$0xff]
    %v300 = vld [vmem:[#allocation9 + $0x20] sm:$0xff]
    %v301 = vld [vmem:[#allocation9 + $0x28] sm:$0xff]
    %v302 = vld [vmem:[#allocation9 + $0x30] sm:$0xff]
    %v303 = vld [vmem:[#allocation9 + $0x38] sm:$0xff]
    %v304 = vld [vmem:[#allocation9 + $0x40] sm:$0xff]
    %v305 = vld [vmem:[#allocation9 + $0x48] sm:$0xff]
    %v306 = vld [vmem:[#allocation9 + $0x50] sm:$0xff]
    %v307 = vld [vmem:[#allocation9 + $0x58] sm:$0xff]
    %v308 = vld [vmem:[#allocation9 + $0x60] sm:$0xff]
    %v309 = vld [vmem:[#allocation9 + $0x68] sm:$0xff]
    %v310 = vld [vmem:[#allocation9 + $0x70] sm:$0xff]
    %v311 = vld [vmem:[#allocation9 + $0x78] sm:$0xff]
    %v312 = vld [vmem:[#allocation9 + $0x80] sm:$0xff]
    %v313 = vld [vmem:[#allocation9 + $0x88] sm:$0xff]
    %v314 = vld [vmem:[#allocation9 + $0x90] sm:$0xff]
    %v315 = vld [vmem:[#allocation9 + $0x98] sm:$0xff]
    %v316 = vld [vmem:[#allocation9 + $0xa0] sm:$0xff]
    %v317 = vld [vmem:[#allocation9 + $0xa8] sm:$0xff]
    %v318 = vld [vmem:[#allocation9 + $0xb0] sm:$0xff]
    %v319 = vld [vmem:[#allocation9 + $0xb8] sm:$0xff]
    %v320 = vld [vmem:[#allocation9 + $0xc0] sm:$0xff]
    %v321 = vld [vmem:[#allocation9 + $0xc8] sm:$0xff]
    %v322 = vld [vmem:[#allocation9 + $0xd0] sm:$0xff]
    %v323 = vld [vmem:[#allocation9 + $0xd8] sm:$0xff]
    %v324 = vld [vmem:[#allocation9 + $0xe0] sm:$0xff]
    %v325 = vld [vmem:[#allocation9 + $0xe8] sm:$0xff]
    %v326 = vld [vmem:[#allocation9 + $0xf0] sm:$0xff]
    %v327 = vld [vmem:[#allocation9 + $0xf8] sm:$0xff]
    %v328 = vld [vmem:[%s6] sm:$0x3]
    %v330 = vlaneseq
    %v331 = vshrl.u32 %v330, 7
    %v332 = vsub.s32 0, %v331
    %v333 = vrot.slane %v328, %v332
    %v334 = vlaneseq
    %v335 = vshrl.u32 %v334, 7
    %v336 = vsub.s32 1, %v335
    %v337 = vrot.slane %v328, %v336
    %340 = vmatprep.subr.mxu0 %v297
    %341 = vmatpush1.msra.mxu0 %v296
    %342 = vmatprep.subr.mxu0 %v299
    %343 = vmatpush1.msra.mxu0 %v298
    %344 = vmatprep.subr.mxu0 %v301
    %345 = vmatpush1.msra.mxu0 %v300
    %346 = vmatprep.subr.mxu0 %v303
    %347 = vmatpush1.msra.mxu0 %v302
    %348 = vmatprep.subr.mxu0 %v305
    %349 = vmatpush1.msra.mxu0 %v304
    %350 = vmatprep.subr.mxu0 %v307
    %351 = vmatpush1.msra.mxu0 %v306
    %352 = vmatprep.subr.mxu0 %v309
    %353 = vmatpush1.msra.mxu0 %v308
    %354 = vmatprep.subr.mxu0 %v311
    %355 = vmatpush1.msra.mxu0 %v310
    %356 = vmatprep.subr.mxu0 %v313
    %357 = vmatpush1.msra.mxu0 %v312
    %358 = vmatprep.subr.mxu0 %v315
    %359 = vmatpush1.msra.mxu0 %v314
    %360 = vmatprep.subr.mxu0 %v317
    %361 = vmatpush1.msra.mxu0 %v316
    %362 = vmatprep.subr.mxu0 %v319
    %363 = vmatpush1.msra.mxu0 %v318
    %364 = vmatprep.subr.mxu0 %v321
    %365 = vmatpush1.msra.mxu0 %v320
    %366 = vmatprep.subr.mxu0 %v323
    %367 = vmatpush1.msra.mxu0 %v322
    %368 = vmatprep.subr.mxu0 %v325
    %369 = vmatpush1.msra.mxu0 %v324
    %370 = vmatprep.subr.mxu0 %v327
    %371 = vmatpush1.msra.mxu0 %v326
    %372 = vmatprep.subr.mxu0 0.0
    %373 = vmatpush1.msra.mxu0 0.0
    %374 = vmatprep.subr.mxu0 0.0
    %375 = vmatpush1.msra.mxu0 0.0
    %376 = vmatprep.subr.mxu0 0.0
    %377 = vmatpush1.msra.mxu0 0.0
    %378 = vmatprep.subr.mxu0 0.0
    %379 = vmatpush1.msra.mxu0 0.0
    %380 = vmatprep.subr.mxu0 0.0
    %381 = vmatpush1.msra.mxu0 0.0
    %382 = vmatprep.subr.mxu0 0.0
    %383 = vmatpush1.msra.mxu0 0.0
    %384 = vmatprep.subr.mxu0 0.0
    %385 = vmatpush1.msra.mxu0 0.0
    %386 = vmatprep.subr.mxu0 0.0
    %387 = vmatpush1.msra.mxu0 0.0
    %388 = vmatprep.subr.mxu0 0.0
    %389 = vmatpush1.msra.mxu0 0.0
    %390 = vmatprep.subr.mxu0 0.0
    %391 = vmatpush1.msra.mxu0 0.0
    %392 = vmatprep.subr.mxu0 0.0
    %393 = vmatpush1.msra.mxu0 0.0
    %394 = vmatprep.subr.mxu0 0.0
    %395 = vmatpush1.msra.mxu0 0.0
    %396 = vmatprep.subr.mxu0 0.0
    %397 = vmatpush1.msra.mxu0 0.0
    %398 = vmatprep.subr.mxu0 0.0
    %399 = vmatpush1.msra.mxu0 0.0
    %400 = vmatprep.subr.mxu0 0.0
    %401 = vmatpush1.msra.mxu0 0.0
    %402 = vmatprep.subr.mxu0 0.0
    %403 = vmatpush1.msra.mxu0 0.0
    %404 = vmatprep.mubr.f32.mxu0 0.0
    %405 = vmatmul.mubr.f32.gmra.mrb[0].mxu0 %v295
    %v406 = vpop.f32.mrb[0].mxu0
    %v407 = vadd.f32 %v333, %v406
    %v408 = vpop.f32.mrb[0].mxu0
    %v409 = vadd.f32 %v337, %v408
    %410 = vdwg.mxu0
    %v411 = vmax.f32 %v407, 0.0
    %v412 = vmax.f32 %v409, 0.0
    %v413 = vld [vmem:[%s7] sm:$0x1]
    %v415 = vlaneseq
    %v416 = vshrl.u32 %v415, 7
    %v417 = vsub.s32 0, %v416
    %v418 = vrot.slane %v413, %v417
    %v420 = vmul.f32 %v411, %v418
    %421 = vadd.xlane.f32.xlu0 %v420
    %v422 = vpop.xlane.xlu0 %421
    %v423 = vld [vmem:[#allocation2] sm:$0x1]
    %v425 = vlaneseq
    %v426 = vshrl.u32 %v425, 7
    %v427 = vsub.s32 0, %v426
    %v428 = vrot.slane %v423, %v427
    %v430 = vadd.f32 %v422, %v428
    %v431 = vld [vmem:[#allocation11] sm:$0xff]
    %v432 = vld [vmem:[#allocation11 + $0x8] sm:$0xff]
    %v433 = vld [vmem:[#allocation11 + $0x10] sm:$0xff]
    %v434 = vld [vmem:[#allocation11 + $0x18] sm:$0xff]
    %v435 = vld [vmem:[#allocation11 + $0x20] sm:$0xff]
    %v436 = vld [vmem:[#allocation11 + $0x28] sm:$0xff]
    %v437 = vld [vmem:[#allocation11 + $0x30] sm:$0xff]
    %v438 = vld [vmem:[#allocation11 + $0x38] sm:$0xff]
    %v439 = vld [vmem:[#allocation11 + $0x40] sm:$0xff]
    %v440 = vld [vmem:[#allocation11 + $0x48] sm:$0xff]
    %v441 = vld [vmem:[#allocation11 + $0x50] sm:$0xff]
    %v442 = vld [vmem:[#allocation11 + $0x58] sm:$0xff]
    %v443 = vld [vmem:[#allocation11 + $0x60] sm:$0xff]
    %v444 = vld [vmem:[#allocation11 + $0x68] sm:$0xff]
    %v445 = vld [vmem:[#allocation11 + $0x70] sm:$0xff]
    %v446 = vld [vmem:[#allocation11 + $0x78] sm:$0xff]
    %v447 = vld [vmem:[%s10] sm:$0x1]
    %v449 = vlaneseq
    %v450 = vshrl.u32 %v449, 7
    %v451 = vsub.s32 0, %v450
    %v452 = vrot.slane %v447, %v451
    %454 = vmatprep.subr.mxu0 0.0
    %455 = vmatpush1.msra.mxu0 %v431
    %456 = vmatprep.subr.mxu0 0.0
    %457 = vmatpush1.msra.mxu0 %v432
    %458 = vmatprep.subr.mxu0 0.0
    %459 = vmatpush1.msra.mxu0 %v433
    %460 = vmatprep.subr.mxu0 0.0
    %461 = vmatpush1.msra.mxu0 %v434
    %462 = vmatprep.subr.mxu0 0.0
    %463 = vmatpush1.msra.mxu0 %v435
    %464 = vmatprep.subr.mxu0 0.0
    %465 = vmatpush1.msra.mxu0 %v436
    %466 = vmatprep.subr.mxu0 0.0
    %467 = vmatpush1.msra.mxu0 %v437
    %468 = vmatprep.subr.mxu0 0.0
    %469 = vmatpush1.msra.mxu0 %v438
    %470 = vmatprep.subr.mxu0 0.0
    %471 = vmatpush1.msra.mxu0 %v439
    %472 = vmatprep.subr.mxu0 0.0
    %473 = vmatpush1.msra.mxu0 %v440
    %474 = vmatprep.subr.mxu0 0.0
    %475 = vmatpush1.msra.mxu0 %v441
    %476 = vmatprep.subr.mxu0 0.0
    %477 = vmatpush1.msra.mxu0 %v442
    %478 = vmatprep.subr.mxu0 0.0
    %479 = vmatpush1.msra.mxu0 %v443
    %480 = vmatprep.subr.mxu0 0.0
    %481 = vmatpush1.msra.mxu0 %v444
    %482 = vmatprep.subr.mxu0 0.0
    %483 = vmatpush1.msra.mxu0 %v445
    %484 = vmatprep.subr.mxu0 0.0
    %485 = vmatpush1.msra.mxu0 %v446
    %486 = vmatprep.subr.mxu0 0.0
    %487 = vmatpush1.msra.mxu0 0.0
    %488 = vmatprep.subr.mxu0 0.0
    %489 = vmatpush1.msra.mxu0 0.0
    %490 = vmatprep.subr.mxu0 0.0
    %491 = vmatpush1.msra.mxu0 0.0
    %492 = vmatprep.subr.mxu0 0.0
    %493 = vmatpush1.msra.mxu0 0.0
    %494 = vmatprep.subr.mxu0 0.0
    %495 = vmatpush1.msra.mxu0 0.0
    %496 = vmatprep.subr.mxu0 0.0
    %497 = vmatpush1.msra.mxu0 0.0
    %498 = vmatprep.subr.mxu0 0.0
    %499 = vmatpush1.msra.mxu0 0.0
    %500 = vmatprep.subr.mxu0 0.0
    %501 = vmatpush1.msra.mxu0 0.0
    %502 = vmatprep.subr.mxu0 0.0
    %503 = vmatpush1.msra.mxu0 0.0
    %504 = vmatprep.subr.mxu0 0.0
    %505 = vmatpush1.msra.mxu0 0.0
    %506 = vmatprep.subr.mxu0 0.0
    %507 = vmatpush1.msra.mxu0 0.0
    %508 = vmatprep.subr.mxu0 0.0
    %509 = vmatpush1.msra.mxu0 0.0
    %510 = vmatprep.subr.mxu0 0.0
    %511 = vmatpush1.msra.mxu0 0.0
    %512 = vmatprep.subr.mxu0 0.0
    %513 = vmatpush1.msra.mxu0 0.0
    %514 = vmatprep.subr.mxu0 0.0
    %515 = vmatpush1.msra.mxu0 0.0
    %516 = vmatprep.subr.mxu0 0.0
    %517 = vmatpush1.msra.mxu0 0.0
    %518 = vmatprep.mubr.f32.mxu0 0.0
    %519 = vmatmul.mubr.f32.gmra.mrb[0].mxu0 %v412
    %v520 = vpop.f32.mrb[0].mxu0
    %v521 = vadd.f32 %v452, %v520
    %v522 = vpop.f32.mrb[0].mxu0
    %523 = vdwg.mxu0
    %525 = vset.pattern.permute.xlu0 0
    %526 = vperm.xlu0 %525, %v430
    %v527 = vpop.permute.xlu0 %526
    %v529 = vadd.f32 %v527, %v521
    %530 = vst [vmem:[#allocation12] sm:$0xff] %v529
    // Predicated region
    $region66: #{tpu_custom_call.1} parent=1 // pred_check
      _
    $region67: #{tpu_custom_call.1} parent=1 // pred_check_branch
      %532 = sbr.rel (0) target = $region69
    $region68: #{tpu_custom_call.1} parent=1 // pred_region
      %s534 = ssub.s32 128, 128
      %535 = vsyncadd [#allocation5], %s534
      %s537 = sshll.u32 [#allocation12], 4
      %s538 = int_to_ptr.vmem [resolvable:$true] %s537
      %540 = dma.vmem_to_hbm [thread:$0]  %s538, 128, %s11, [#allocation5]
    $region69: #{tpu_custom_call.1} parent=1 // pred_fallthru
      _
    // Predicated region
    $region70: #{tpu_custom_call.1} parent=1 // pred_check
      _
    $region71: #{tpu_custom_call.1} parent=1 // pred_check_branch
      %542 = sbr.rel (0) target = $region73
    $region72: #{tpu_custom_call.1} parent=1 // pred_region
      %543 = dma.done [#allocation5], 128
    $region73: #{tpu_custom_call.1} parent=1 // pred_fallthru
      _
    %544 = vsyncpa [#allocation4], 1
    %545 = vsyncpa [#allocation7], 1
    %546 = vsyncpa [#allocation10], 1
    %547 = vsyncpa [#allocation5], 1

// kernel: tpu_custom_call.1
$region0: #{tpu_custom_call.1}
  #allocation0 [shape = 'u32[]', space=smem, size = 0x4, offset = 0x4, fixed_abs, tag = 'smem constant byte address 0x4 - core index']
  #allocation1 [shape = 'u32[144,128]{1,0:T(1,128)}', space=vmem, size = 0x12000, scoped, tag = 'internal scratch']
  #allocation2 [shape = 'f32[1,1]{1,0:T(1,128)S(1)}', space=vmem, size = 0x200, scoped, tag = 'scoped memory for tpu_custom_call.1']
  %s0 = inlined_call_operand.hbm [shape: f32[8,128], index: 0, kind: input, shape index: {}]
  %s1 = inlined_call_operand.hbm [shape: f32[128,128], index: 1, kind: input, shape index: {}]
  %s2 = inlined_call_operand.vmem [shape: f32[1,128], index: 2, kind: input, shape index: {}]
  %s3 = inlined_call_operand.hbm [shape: f32[128,128], index: 3, kind: input, shape index: {}]
  %s4 = inlined_call_operand.vmem [shape: f32[1,128], index: 4, kind: input, shape index: {}]
  %s5 = inlined_call_operand.hbm [shape: f32[128,256], index: 5, kind: input, shape index: {}]
  %s6 = inlined_call_operand.vmem [shape: f32[1,256], index: 6, kind: input, shape index: {}]
  %s7 = inlined_call_operand.vmem [shape: f32[1,128], index: 7, kind: input, shape index: {}]
  %s8 = inlined_call_operand.<no memory space> [shape: f32[1,1], index: 8, kind: input, shape index: {}]
  %s9 = inlined_call_operand.hbm [shape: f32[128,128], index: 9, kind: input, shape index: {}]
  %s10 = inlined_call_operand.vmem [shape: f32[1,128], index: 10, kind: input, shape index: {}]
  %s11 = inlined_call_operand.hbm [shape: f32[8,128], index: 11, kind: output, shape index: {}]
  %s12 = sld [smem:[#allocation0]]
  $region74: #{tpu_custom_call.1} parent=0
    _
  %s14 = ssub.s32 1, %s12
  %s15 = scalar_select 0, %s14, %s12
  %v16 = vstv %s8
  %17 = vst [vmem:[#allocation2] sm:$0x1] %v16
  $region1: #{tpu_custom_call.1} parent=0
    #allocation3 [shape = 'u8[4096]{0}', space=vmem, size = 0x1000, scoped, tag = 'input window, operand 0, single buffered']
    #allocation4 [shape = 's32[1]{0}', space=sflag, size = 0x4, scoped, tag = 'scoped memory for tpu_custom_call.1']
    #allocation5 [shape = 's32[1]{0}', space=sflag, size = 0x4, scoped, tag = 'scoped memory for tpu_custom_call.1']
    #allocation6 [shape = 'u8[65536]{0}', space=vmem, size = 0x10000, scoped, tag = 'input window, operand 1, single buffered']
    #allocation7 [shape = 's32[1]{0}', space=sflag, size = 0x4, scoped, tag = 'scoped memory for tpu_custom_call.1']
    #allocation8 [shape = 'u8[65536]{0}', space=vmem, size = 0x10000, scoped, tag = 'input window, operand 3, single buffered']
    #allocation9 [shape = 'u8[131072]{0}', space=vmem, size = 0x20000, scoped, tag = 'input window, operand 5, single buffered']
    #allocation10 [shape = 's32[1]{0}', space=sflag, size = 0x4, scoped, tag = 'scoped memory for tpu_custom_call.1']
    #allocation11 [shape = 'u8[65536]{0}', space=vmem, size = 0x10000, scoped, tag = 'input window, operand 9, single buffered']
    #allocation12 [shape = 'u8[4096]{0}', space=vmem, size = 0x1000, scoped, tag = 'output window, operand 0, single buffered']
    %18 = vsyncpa [#allocation4], 0
    %19 = vsyncpa [#allocation7], 0
    %20 = vsyncpa [#allocation10], 0
    %21 = vsyncpa [#allocation5], 0
    // Predicated region
    $region2: #{tpu_custom_call.1} parent=1 // pred_check
      _
    $region3: #{tpu_custom_call.1} parent=1 // pred_check_branch
      %23 = sbr.rel (0) target = $region5
    $region4: #{tpu_custom_call.1} parent=1 // pred_region
      %s25 = ssub.s32 128, 128
      %26 = vsyncadd [#allocation4], %s25
      %s28 = sshll.u32 [#allocation3], 4
      %s29 = int_to_ptr.vmem [resolvable:$true] %s28
      %31 = dma.hbm_to_vmem [thread:$0]  %s0, 128, %s29, [#allocation4]
    $region5: #{tpu_custom_call.1} parent=1 // pred_fallthru
      _
    // Predicated region
    $region6: #{tpu_custom_call.1} parent=1 // pred_check
      _
    $region7: #{tpu_custom_call.1} parent=1 // pred_check_branch
      %33 = sbr.rel (0) target = $region9
    $region8: #{tpu_custom_call.1} parent=1 // pred_region
      %s35 = ssub.s32 2048, 2048
      %36 = vsyncadd [#allocation7], %s35
      %s37 = sshll.u32 [#allocation6], 4
      %s38 = int_to_ptr.vmem [resolvable:$true] %s37
      %43 = dma.hbm_to_vmem [thread:$0]  %s1, 2048, %s38, [#allocation7], 128, 128, 8
    $region9: #{tpu_custom_call.1} parent=1 // pred_fallthru
      _
    // Predicated region
    $region10: #{tpu_custom_call.1} parent=1 // pred_check
      _
    $region11: #{tpu_custom_call.1} parent=1 // pred_check_branch
      %45 = sbr.rel (0) target = $region13
    $region12: #{tpu_custom_call.1} parent=1 // pred_region
      _
    $region13: #{tpu_custom_call.1} parent=1 // pred_fallthru
      _
    // Predicated region
    $region14: #{tpu_custom_call.1} parent=1 // pred_check
      _
    $region15: #{tpu_custom_call.1} parent=1 // pred_check_branch
      %47 = sbr.rel (0) target = $region17
    $region16: #{tpu_custom_call.1} parent=1 // pred_region
      %s49 = ssub.s32 2048, 2048
      %50 = vsyncadd [#allocation7], %s49
      %s51 = sshll.u32 [#allocation8], 4
      %s52 = int_to_ptr.vmem [resolvable:$true] %s51
      %57 = dma.hbm_to_vmem [thread:$0]  %s3, 2048, %s52, [#allocation7], 128, 128, 8
    $region17: #{tpu_custom_call.1} parent=1 // pred_fallthru
      _
    // Predicated region
    $region18: #{tpu_custom_call.1} parent=1 // pred_check
      _
    $region19: #{tpu_custom_call.1} parent=1 // pred_check_branch
      %59 = sbr.rel (0) target = $region21
    $region20: #{tpu_custom_call.1} parent=1 // pred_region
      _
    $region21: #{tpu_custom_call.1} parent=1 // pred_fallthru
      _
    // Predicated region
    $region22: #{tpu_custom_call.1} parent=1 // pred_check
      _
    $region23: #{tpu_custom_call.1} parent=1 // pred_check_branch
      %61 = sbr.rel (0) target = $region25
    $region24: #{tpu_custom_call.1} parent=1 // pred_region
      %s63 = ssub.s32 4096, 4096
      %64 = vsyncadd [#allocation10], %s63
      %s65 = sshll.u32 [#allocation9], 4
      %s66 = int_to_ptr.vmem [resolvable:$true] %s65
      %71 = dma.hbm_to_vmem [thread:$0]  %s5, 4096, %s66, [#allocation10], 256, 256, 16
    $region25: #{tpu_custom_call.1} parent=1 // pred_fallthru
      _
    // Predicated region
    $region26: #{tpu_custom_call.1} parent=1 // pred_check
      _
    $region27: #{tpu_custom_call.1} parent=1 // pred_check_branch
      %73 = sbr.rel (0) target = $region29
    $region28: #{tpu_custom_call.1} parent=1 // pred_region
      _
    $region29: #{tpu_custom_call.1} parent=1 // pred_fallthru
      _
    // Predicated region
    $region30: #{tpu_custom_call.1} parent=1 // pred_check
      _
    $region31: #{tpu_custom_call.1} parent=1 // pred_check_branch
      %75 = sbr.rel (0) target = $region33
    $region32: #{tpu_custom_call.1} parent=1 // pred_region
      _
    $region33: #{tpu_custom_call.1} parent=1 // pred_fallthru
      _
    // Predicated region
    $region34: #{tpu_custom_call.1} parent=1 // pred_check
      _
    $region35: #{tpu_custom_call.1} parent=1 // pred_check_branch
      %77 = sbr.rel (0) target = $region37
    $region36: #{tpu_custom_call.1} parent=1 // pred_region
      _
    $region37: #{tpu_custom_call.1} parent=1 // pred_fallthru
      _
    // Predicated region
    $region38: #{tpu_custom_call.1} parent=1 // pred_check
      _
    $region39: #{tpu_custom_call.1} parent=1 // pred_check_branch
      %79 = sbr.rel (0) target = $region41
    $region40: #{tpu_custom_call.1} parent=1 // pred_region
      %s81 = ssub.s32 2048, 2048
      %82 = vsyncadd [#allocation10], %s81
      %s83 = sshll.u32 [#allocation11], 4
      %s84 = int_to_ptr.vmem [resolvable:$true] %s83
      %89 = dma.hbm_to_vmem [thread:$0]  %s9, 2048, %s84, [#allocation10], 128, 128, 8
    $region41: #{tpu_custom_call.1} parent=1 // pred_fallthru
      _
    // Predicated region
    $region42: #{tpu_custom_call.1} parent=1 // pred_check
      _
    $region43: #{tpu_custom_call.1} parent=1 // pred_check_branch
      %91 = sbr.rel (0) target = $region45
    $region44: #{tpu_custom_call.1} parent=1 // pred_region
      _
    $region45: #{tpu_custom_call.1} parent=1 // pred_fallthru
      _
    // Predicated region
    $region46: #{tpu_custom_call.1} parent=1 // pred_check
      _
    $region47: #{tpu_custom_call.1} parent=1 // pred_check_branch
      %93 = sbr.rel (0) target = $region49
    $region48: #{tpu_custom_call.1} parent=1 // pred_region
      %94 = dma.done [#allocation4], 128
    $region49: #{tpu_custom_call.1} parent=1 // pred_fallthru
      _
    // Predicated region
    $region50: #{tpu_custom_call.1} parent=1 // pred_check
      _
    $region51: #{tpu_custom_call.1} parent=1 // pred_check_branch
      %96 = sbr.rel (0) target = $region53
    $region52: #{tpu_custom_call.1} parent=1 // pred_region
      %97 = dma.done [#allocation7], 2048
    $region53: #{tpu_custom_call.1} parent=1 // pred_fallthru
      _
    // Predicated region
    $region54: #{tpu_custom_call.1} parent=1 // pred_check
      _
    $region55: #{tpu_custom_call.1} parent=1 // pred_check_branch
      %99 = sbr.rel (0) target = $region57
    $region56: #{tpu_custom_call.1} parent=1 // pred_region
      %100 = dma.done [#allocation7], 2048
    $region57: #{tpu_custom_call.1} parent=1 // pred_fallthru
      _
    // Predicated region
    $region58: #{tpu_custom_call.1} parent=1 // pred_check
      _
    $region59: #{tpu_custom_call.1} parent=1 // pred_check_branch
      %102 = sbr.rel (0) target = $region61
    $region60: #{tpu_custom_call.1} parent=1 // pred_region
      %103 = dma.done [#allocation10], 4096
    $region61: #{tpu_custom_call.1} parent=1 // pred_fallthru
      _
    // Predicated region
    $region62: #{tpu_custom_call.1} parent=1 // pred_check
      _
    $region63: #{tpu_custom_call.1} parent=1 // pred_check_branch
      %105 = sbr.rel (0) target = $region65
    $region64: #{tpu_custom_call.1} parent=1 // pred_region
      %106 = dma.done [#allocation10], 2048
    $region65: #{tpu_custom_call.1} parent=1 // pred_fallthru
      _
    %v107 = vld [vmem:[#allocation3] sm:$0xff]
    %v108 = vld [vmem:[#allocation6] sm:$0xff]
    %v109 = vld [vmem:[#allocation6 + $0x8] sm:$0xff]
    %v110 = vld [vmem:[#allocation6 + $0x10] sm:$0xff]
    %v111 = vld [vmem:[#allocation6 + $0x18] sm:$0xff]
    %v112 = vld [vmem:[#allocation6 + $0x20] sm:$0xff]
    %v113 = vld [vmem:[#allocation6 + $0x28] sm:$0xff]
    %v114 = vld [vmem:[#allocation6 + $0x30] sm:$0xff]
    %v115 = vld [vmem:[#allocation6 + $0x38] sm:$0xff]
    %v116 = vld [vmem:[#allocation6 + $0x40] sm:$0xff]
    %v117 = vld [vmem:[#allocation6 + $0x48] sm:$0xff]
    %v118 = vld [vmem:[#allocation6 + $0x50] sm:$0xff]
    %v119 = vld [vmem:[#allocation6 + $0x58] sm:$0xff]
    %v120 = vld [vmem:[#allocation6 + $0x60] sm:$0xff]
    %v121 = vld [vmem:[#allocation6 + $0x68] sm:$0xff]
    %v122 = vld [vmem:[#allocation6 + $0x70] sm:$0xff]
    %v123 = vld [vmem:[#allocation6 + $0x78] sm:$0xff]
    %v124 = vld [vmem:[%s2] sm:$0x1]
    %v126 = vlaneseq
    %v127 = vshrl.u32 %v126, 7
    %v128 = vsub.s32 0, %v127
    %v129 = vrot.slane %v124, %v128
    %131 = vmatprep.subr.mxu0 0.0
    %132 = vmatpush1.msra.mxu0 %v108
    %133 = vmatprep.subr.mxu0 0.0
    %134 = vmatpush1.msra.mxu0 %v109
    %135 = vmatprep.subr.mxu0 0.0
    %136 = vmatpush1.msra.mxu0 %v110
    %137 = vmatprep.subr.mxu0 0.0
    %138 = vmatpush1.msra.mxu0 %v111
    %139 = vmatprep.subr.mxu0 0.0
    %140 = vmatpush1.msra.mxu0 %v112
    %141 = vmatprep.subr.mxu0 0.0
    %142 = vmatpush1.msra.mxu0 %v113
    %143 = vmatprep.subr.mxu0 0.0
    %144 = vmatpush1.msra.mxu0 %v114
    %145 = vmatprep.subr.mxu0 0.0
    %146 = vmatpush1.msra.mxu0 %v115
    %147 = vmatprep.subr.mxu0 0.0
    %148 = vmatpush1.msra.mxu0 %v116
    %149 = vmatprep.subr.mxu0 0.0
    %150 = vmatpush1.msra.mxu0 %v117
    %151 = vmatprep.subr.mxu0 0.0
    %152 = vmatpush1.msra.mxu0 %v118
    %153 = vmatprep.subr.mxu0 0.0
    %154 = vmatpush1.msra.mxu0 %v119
    %155 = vmatprep.subr.mxu0 0.0
    %156 = vmatpush1.msra.mxu0 %v120
    %157 = vmatprep.subr.mxu0 0.0
    %158 = vmatpush1.msra.mxu0 %v121
    %159 = vmatprep.subr.mxu0 0.0
    %160 = vmatpush1.msra.mxu0 %v122
    %161 = vmatprep.subr.mxu0 0.0
    %162 = vmatpush1.msra.mxu0 %v123
    %163 = vmatprep.subr.mxu0 0.0
    %164 = vmatpush1.msra.mxu0 0.0
    %165 = vmatprep.subr.mxu0 0.0
    %166 = vmatpush1.msra.mxu0 0.0
    %167 = vmatprep.subr.mxu0 0.0
    %168 = vmatpush1.msra.mxu0 0.0
    %169 = vmatprep.subr.mxu0 0.0
    %170 = vmatpush1.msra.mxu0 0.0
    %171 = vmatprep.subr.mxu0 0.0
    %172 = vmatpush1.msra.mxu0 0.0
    %173 = vmatprep.subr.mxu0 0.0
    %174 = vmatpush1.msra.mxu0 0.0
    %175 = vmatprep.subr.mxu0 0.0
    %176 = vmatpush1.msra.mxu0 0.0
    %177 = vmatprep.subr.mxu0 0.0
    %178 = vmatpush1.msra.mxu0 0.0
    %179 = vmatprep.subr.mxu0 0.0
    %180 = vmatpush1.msra.mxu0 0.0
    %181 = vmatprep.subr.mxu0 0.0
    %182 = vmatpush1.msra.mxu0 0.0
    %183 = vmatprep.subr.mxu0 0.0
    %184 = vmatpush1.msra.mxu0 0.0
    %185 = vmatprep.subr.mxu0 0.0
    %186 = vmatpush1.msra.mxu0 0.0
    %187 = vmatprep.subr.mxu0 0.0
    %188 = vmatpush1.msra.mxu0 0.0
    %189 = vmatprep.subr.mxu0 0.0
    %190 = vmatpush1.msra.mxu0 0.0
    %191 = vmatprep.subr.mxu0 0.0
    %192 = vmatpush1.msra.mxu0 0.0
    %193 = vmatprep.subr.mxu0 0.0
    %194 = vmatpush1.msra.mxu0 0.0
    %195 = vmatprep.mubr.f32.mxu0 0.0
    %196 = vmatmul.mubr.f32.gmra.mrb[0].mxu0 %v107
    %v197 = vpop.f32.mrb[0].mxu0
    %v198 = vadd.f32 %v129, %v197
    %v199 = vpop.f32.mrb[0].mxu0
    %200 = vdwg.mxu0
    %v201 = vmax.f32 %v198, 0.0
    %v202 = vld [vmem:[#allocation8] sm:$0xff]
    %v203 = vld [vmem:[#allocation8 + $0x8] sm:$0xff]
    %v204 = vld [vmem:[#allocation8 + $0x10] sm:$0xff]
    %v205 = vld [vmem:[#allocation8 + $0x18] sm:$0xff]
    %v206 = vld [vmem:[#allocation8 + $0x20] sm:$0xff]
    %v207 = vld [vmem:[#allocation8 + $0x28] sm:$0xff]
    %v208 = vld [vmem:[#allocation8 + $0x30] sm:$0xff]
    %v209 = vld [vmem:[#allocation8 + $0x38] sm:$0xff]
    %v210 = vld [vmem:[#allocation8 + $0x40] sm:$0xff]
    %v211 = vld [vmem:[#allocation8 + $0x48] sm:$0xff]
    %v212 = vld [vmem:[#allocation8 + $0x50] sm:$0xff]
    %v213 = vld [vmem:[#allocation8 + $0x58] sm:$0xff]
    %v214 = vld [vmem:[#allocation8 + $0x60] sm:$0xff]
    %v215 = vld [vmem:[#allocation8 + $0x68] sm:$0xff]
    %v216 = vld [vmem:[#allocation8 + $0x70] sm:$0xff]
    %v217 = vld [vmem:[#allocation8 + $0x78] sm:$0xff]
    %v218 = vld [vmem:[%s4] sm:$0x1]
    %v220 = vlaneseq
    %v221 = vshrl.u32 %v220, 7
    %v222 = vsub.s32 0, %v221
    %v223 = vrot.slane %v218, %v222
    %225 = vmatprep.subr.mxu0 0.0
    %226 = vmatpush1.msra.mxu0 %v202
    %227 = vmatprep.subr.mxu0 0.0
    %228 = vmatpush1.msra.mxu0 %v203
    %229 = vmatprep.subr.mxu0 0.0
    %230 = vmatpush1.msra.mxu0 %v204
    %231 = vmatprep.subr.mxu0 0.0
    %232 = vmatpush1.msra.mxu0 %v205
    %233 = vmatprep.subr.mxu0 0.0
    %234 = vmatpush1.msra.mxu0 %v206
    %235 = vmatprep.subr.mxu0 0.0
    %236 = vmatpush1.msra.mxu0 %v207
    %237 = vmatprep.subr.mxu0 0.0
    %238 = vmatpush1.msra.mxu0 %v208
    %239 = vmatprep.subr.mxu0 0.0
    %240 = vmatpush1.msra.mxu0 %v209
    %241 = vmatprep.subr.mxu0 0.0
    %242 = vmatpush1.msra.mxu0 %v210
    %243 = vmatprep.subr.mxu0 0.0
    %244 = vmatpush1.msra.mxu0 %v211
    %245 = vmatprep.subr.mxu0 0.0
    %246 = vmatpush1.msra.mxu0 %v212
    %247 = vmatprep.subr.mxu0 0.0
    %248 = vmatpush1.msra.mxu0 %v213
    %249 = vmatprep.subr.mxu0 0.0
    %250 = vmatpush1.msra.mxu0 %v214
    %251 = vmatprep.subr.mxu0 0.0
    %252 = vmatpush1.msra.mxu0 %v215
    %253 = vmatprep.subr.mxu0 0.0
    %254 = vmatpush1.msra.mxu0 %v216
    %255 = vmatprep.subr.mxu0 0.0
    %256 = vmatpush1.msra.mxu0 %v217
    %257 = vmatprep.subr.mxu0 0.0
    %258 = vmatpush1.msra.mxu0 0.0
    %259 = vmatprep.subr.mxu0 0.0
    %260 = vmatpush1.msra.mxu0 0.0
    %261 = vmatprep.subr.mxu0 0.0
    %262 = vmatpush1.msra.mxu0 0.0
    %263 = vmatprep.subr.mxu0 0.0
    %264 = vmatpush1.msra.mxu0 0.0
    %265 = vmatprep.subr.mxu0 0.0
    %266 = vmatpush1.msra.mxu0 0.0
    %267 = vmatprep.subr.mxu0 0.0
    %268 = vmatpush1.msra.mxu0 0.0
    %269 = vmatprep.subr.mxu0 0.0
    %270 = vmatpush1.msra.mxu0 0.0
    %271 = vmatprep.subr.mxu0 0.0
    %272 = vmatpush1.msra.mxu0 0.0
    %273 = vmatprep.subr.mxu0 0.0
    %274 = vmatpush1.msra.mxu0 0.0
    %275 = vmatprep.subr.mxu0 0.0
    %276 = vmatpush1.msra.mxu0 0.0
    %277 = vmatprep.subr.mxu0 0.0
    %278 = vmatpush1.msra.mxu0 0.0
    %279 = vmatprep.subr.mxu0 0.0
    %280 = vmatpush1.msra.mxu0 0.0
    %281 = vmatprep.subr.mxu0 0.0
    %282 = vmatpush1.msra.mxu0 0.0
    %283 = vmatprep.subr.mxu0 0.0
    %284 = vmatpush1.msra.mxu0 0.0
    %285 = vmatprep.subr.mxu0 0.0
    %286 = vmatpush1.msra.mxu0 0.0
    %287 = vmatprep.subr.mxu0 0.0
    %288 = vmatpush1.msra.mxu0 0.0
    %289 = vmatprep.mubr.f32.mxu0 0.0
    %290 = vmatmul.mubr.f32.gmra.mrb[0].mxu0 %v201
    %v291 = vpop.f32.mrb[0].mxu0
    %v292 = vadd.f32 %v223, %v291
    %v293 = vpop.f32.mrb[0].mxu0
    %294 = vdwg.mxu0
    %v295 = vmax.f32 %v292, 0.0
    %v296 = vld [vmem:[#allocation9] sm:$0xff]
    %v297 = vld [vmem:[#allocation9 + $0x8] sm:$0xff]
    %v298 = vld [vmem:[#allocation9 + $0x10] sm:$0xff]
    %v299 = vld [vmem:[#allocation9 + $0x18] sm:$0xff]
    %v300 = vld [vmem:[#allocation9 + $0x20] sm:$0xff]
    %v301 = vld [vmem:[#allocation9 + $0x28] sm:$0xff]
    %v302 = vld [vmem:[#allocation9 + $0x30] sm:$0xff]
    %v303 = vld [vmem:[#allocation9 + $0x38] sm:$0xff]
    %v304 = vld [vmem:[#allocation9 + $0x40] sm:$0xff]
    %v305 = vld [vmem:[#allocation9 + $0x48] sm:$0xff]
    %v306 = vld [vmem:[#allocation9 + $0x50] sm:$0xff]
    %v307 = vld [vmem:[#allocation9 + $0x58] sm:$0xff]
    %v308 = vld [vmem:[#allocation9 + $0x60] sm:$0xff]
    %v309 = vld [vmem:[#allocation9 + $0x68] sm:$0xff]
    %v310 = vld [vmem:[#allocation9 + $0x70] sm:$0xff]
    %v311 = vld [vmem:[#allocation9 + $0x78] sm:$0xff]
    %v312 = vld [vmem:[#allocation9 + $0x80] sm:$0xff]
    %v313 = vld [vmem:[#allocation9 + $0x88] sm:$0xff]
    %v314 = vld [vmem:[#allocation9 + $0x90] sm:$0xff]
    %v315 = vld [vmem:[#allocation9 + $0x98] sm:$0xff]
    %v316 = vld [vmem:[#allocation9 + $0xa0] sm:$0xff]
    %v317 = vld [vmem:[#allocation9 + $0xa8] sm:$0xff]
    %v318 = vld [vmem:[#allocation9 + $0xb0] sm:$0xff]
    %v319 = vld [vmem:[#allocation9 + $0xb8] sm:$0xff]
    %v320 = vld [vmem:[#allocation9 + $0xc0] sm:$0xff]
    %v321 = vld [vmem:[#allocation9 + $0xc8] sm:$0xff]
    %v322 = vld [vmem:[#allocation9 + $0xd0] sm:$0xff]
    %v323 = vld [vmem:[#allocation9 + $0xd8] sm:$0xff]
    %v324 = vld [vmem:[#allocation9 + $0xe0] sm:$0xff]
    %v325 = vld [vmem:[#allocation9 + $0xe8] sm:$0xff]
    %v326 = vld [vmem:[#allocation9 + $0xf0] sm:$0xff]
    %v327 = vld [vmem:[#allocation9 + $0xf8] sm:$0xff]
    %v328 = vld [vmem:[%s6] sm:$0x3]
    %v330 = vlaneseq
    %v331 = vshrl.u32 %v330, 7
    %v332 = vsub.s32 0, %v331
    %v333 = vrot.slane %v328, %v332
    %v334 = vlaneseq
    %v335 = vshrl.u32 %v334, 7
    %v336 = vsub.s32 1, %v335
    %v337 = vrot.slane %v328, %v336
    %340 = vmatprep.subr.mxu0 %v297
    %341 = vmatpush1.msra.mxu0 %v296
    %342 = vmatprep.subr.mxu0 %v299
    %343 = vmatpush1.msra.mxu0 %v298
    %344 = vmatprep.subr.mxu0 %v301
    %345 = vmatpush1.msra.mxu0 %v300
    %346 = vmatprep.subr.mxu0 %v303
    %347 = vmatpush1.msra.mxu0 %v302
    %348 = vmatprep.subr.mxu0 %v305
    %349 = vmatpush1.msra.mxu0 %v304
    %350 = vmatprep.subr.mxu0 %v307
    %351 = vmatpush1.msra.mxu0 %v306
    %352 = vmatprep.subr.mxu0 %v309
    %353 = vmatpush1.msra.mxu0 %v308
    %354 = vmatprep.subr.mxu0 %v311
    %355 = vmatpush1.msra.mxu0 %v310
    %356 = vmatprep.subr.mxu0 %v313
    %357 = vmatpush1.msra.mxu0 %v312
    %358 = vmatprep.subr.mxu0 %v315
    %359 = vmatpush1.msra.mxu0 %v314
    %360 = vmatprep.subr.mxu0 %v317
    %361 = vmatpush1.msra.mxu0 %v316
    %362 = vmatprep.subr.mxu0 %v319
    %363 = vmatpush1.msra.mxu0 %v318
    %364 = vmatprep.subr.mxu0 %v321
    %365 = vmatpush1.msra.mxu0 %v320
    %366 = vmatprep.subr.mxu0 %v323
    %367 = vmatpush1.msra.mxu0 %v322
    %368 = vmatprep.subr.mxu0 %v325
    %369 = vmatpush1.msra.mxu0 %v324
    %370 = vmatprep.subr.mxu0 %v327
    %371 = vmatpush1.msra.mxu0 %v326
    %372 = vmatprep.subr.mxu0 0.0
    %373 = vmatpush1.msra.mxu0 0.0
    %374 = vmatprep.subr.mxu0 0.0
    %375 = vmatpush1.msra.mxu0 0.0
    %376 = vmatprep.subr.mxu0 0.0
    %377 = vmatpush1.msra.mxu0 0.0
    %378 = vmatprep.subr.mxu0 0.0
    %379 = vmatpush1.msra.mxu0 0.0
    %380 = vmatprep.subr.mxu0 0.0
    %381 = vmatpush1.msra.mxu0 0.0
    %382 = vmatprep.subr.mxu0 0.0
    %383 = vmatpush1.msra.mxu0 0.0
    %384 = vmatprep.subr.mxu0 0.0
    %385 = vmatpush1.msra.mxu0 0.0
    %386 = vmatprep.subr.mxu0 0.0
    %387 = vmatpush1.msra.mxu0 0.0
    %388 = vmatprep.subr.mxu0 0.0
    %389 = vmatpush1.msra.mxu0 0.0
    %390 = vmatprep.subr.mxu0 0.0
    %391 = vmatpush1.msra.mxu0 0.0
    %392 = vmatprep.subr.mxu0 0.0
    %393 = vmatpush1.msra.mxu0 0.0
    %394 = vmatprep.subr.mxu0 0.0
    %395 = vmatpush1.msra.mxu0 0.0
    %396 = vmatprep.subr.mxu0 0.0
    %397 = vmatpush1.msra.mxu0 0.0
    %398 = vmatprep.subr.mxu0 0.0
    %399 = vmatpush1.msra.mxu0 0.0
    %400 = vmatprep.subr.mxu0 0.0
    %401 = vmatpush1.msra.mxu0 0.0
    %402 = vmatprep.subr.mxu0 0.0
    %403 = vmatpush1.msra.mxu0 0.0
    %404 = vmatprep.mubr.f32.mxu0 0.0
    %405 = vmatmul.mubr.f32.gmra.mrb[0].mxu0 %v295
    %v406 = vpop.f32.mrb[0].mxu0
    %v407 = vadd.f32 %v333, %v406
    %v408 = vpop.f32.mrb[0].mxu0
    %v409 = vadd.f32 %v337, %v408
    %410 = vdwg.mxu0
    %v411 = vmax.f32 %v407, 0.0
    %v412 = vmax.f32 %v409, 0.0
    %v413 = vld [vmem:[%s7] sm:$0x1]
    %v415 = vlaneseq
    %v416 = vshrl.u32 %v415, 7
    %v417 = vsub.s32 0, %v416
    %v418 = vrot.slane %v413, %v417
    %v420 = vmul.f32 %v411, %v418
    %421 = vadd.xlane.f32.xlu0 %v420
    %v422 = vpop.xlane.xlu0 %421
    %v423 = vld [vmem:[#allocation2] sm:$0x1]
    %v425 = vlaneseq
    %v426 = vshrl.u32 %v425, 7
    %v427 = vsub.s32 0, %v426
    %v428 = vrot.slane %v423, %v427
    %v430 = vadd.f32 %v422, %v428
    %v431 = vld [vmem:[#allocation11] sm:$0xff]
    %v432 = vld [vmem:[#allocation11 + $0x8] sm:$0xff]
    %v433 = vld [vmem:[#allocation11 + $0x10] sm:$0xff]
    %v434 = vld [vmem:[#allocation11 + $0x18] sm:$0xff]
    %v435 = vld [vmem:[#allocation11 + $0x20] sm:$0xff]
    %v436 = vld [vmem:[#allocation11 + $0x28] sm:$0xff]
    %v437 = vld [vmem:[#allocation11 + $0x30] sm:$0xff]
    %v438 = vld [vmem:[#allocation11 + $0x38] sm:$0xff]
    %v439 = vld [vmem:[#allocation11 + $0x40] sm:$0xff]
    %v440 = vld [vmem:[#allocation11 + $0x48] sm:$0xff]
    %v441 = vld [vmem:[#allocation11 + $0x50] sm:$0xff]
    %v442 = vld [vmem:[#allocation11 + $0x58] sm:$0xff]
    %v443 = vld [vmem:[#allocation11 + $0x60] sm:$0xff]
    %v444 = vld [vmem:[#allocation11 + $0x68] sm:$0xff]
    %v445 = vld [vmem:[#allocation11 + $0x70] sm:$0xff]
    %v446 = vld [vmem:[#allocation11 + $0x78] sm:$0xff]
    %v447 = vld [vmem:[%s10] sm:$0x1]
    %v449 = vlaneseq
    %v450 = vshrl.u32 %v449, 7
    %v451 = vsub.s32 0, %v450
    %v452 = vrot.slane %v447, %v451
    %454 = vmatprep.subr.mxu0 0.0
    %455 = vmatpush1.msra.mxu0 %v431
    %456 = vmatprep.subr.mxu0 0.0
    %457 = vmatpush1.msra.mxu0 %v432
    %458 = vmatprep.subr.mxu0 0.0
    %459 = vmatpush1.msra.mxu0 %v433
    %460 = vmatprep.subr.mxu0 0.0
    %461 = vmatpush1.msra.mxu0 %v434
    %462 = vmatprep.subr.mxu0 0.0
    %463 = vmatpush1.msra.mxu0 %v435
    %464 = vmatprep.subr.mxu0 0.0
    %465 = vmatpush1.msra.mxu0 %v436
    %466 = vmatprep.subr.mxu0 0.0
    %467 = vmatpush1.msra.mxu0 %v437
    %468 = vmatprep.subr.mxu0 0.0
    %469 = vmatpush1.msra.mxu0 %v438
    %470 = vmatprep.subr.mxu0 0.0
    %471 = vmatpush1.msra.mxu0 %v439
    %472 = vmatprep.subr.mxu0 0.0
    %473 = vmatpush1.msra.mxu0 %v440
    %474 = vmatprep.subr.mxu0 0.0
    %475 = vmatpush1.msra.mxu0 %v441
    %476 = vmatprep.subr.mxu0 0.0
    %477 = vmatpush1.msra.mxu0 %v442
    %478 = vmatprep.subr.mxu0 0.0
    %479 = vmatpush1.msra.mxu0 %v443
    %480 = vmatprep.subr.mxu0 0.0
    %481 = vmatpush1.msra.mxu0 %v444
    %482 = vmatprep.subr.mxu0 0.0
    %483 = vmatpush1.msra.mxu0 %v445
    %484 = vmatprep.subr.mxu0 0.0
    %485 = vmatpush1.msra.mxu0 %v446
    %486 = vmatprep.subr.mxu0 0.0
    %487 = vmatpush1.msra.mxu0 0.0
    %488 = vmatprep.subr.mxu0 0.0
    %489 = vmatpush1.msra.mxu0 0.0
    %490 = vmatprep.subr.mxu0 0.0
    %491 = vmatpush1.msra.mxu0 0.0
    %492 = vmatprep.subr.mxu0 0.0
    %493 = vmatpush1.msra.mxu0 0.0
    %494 = vmatprep.subr.mxu0 0.0
    %495 = vmatpush1.msra.mxu0 0.0
    %496 = vmatprep.subr.mxu0 0.0
    %497 = vmatpush1.msra.mxu0 0.0
    %498 = vmatprep.subr.mxu0 0.0
    %499 = vmatpush1.msra.mxu0 0.0
    %500 = vmatprep.subr.mxu0 0.0
    %501 = vmatpush1.msra.mxu0 0.0
    %502 = vmatprep.subr.mxu0 0.0
    %503 = vmatpush1.msra.mxu0 0.0
    %504 = vmatprep.subr.mxu0 0.0
    %505 = vmatpush1.msra.mxu0 0.0
    %506 = vmatprep.subr.mxu0 0.0
    %507 = vmatpush1.msra.mxu0 0.0
    %508 = vmatprep.subr.mxu0 0.0
    %509 = vmatpush1.msra.mxu0 0.0
    %510 = vmatprep.subr.mxu0 0.0
    %511 = vmatpush1.msra.mxu0 0.0
    %512 = vmatprep.subr.mxu0 0.0
    %513 = vmatpush1.msra.mxu0 0.0
    %514 = vmatprep.subr.mxu0 0.0
    %515 = vmatpush1.msra.mxu0 0.0
    %516 = vmatprep.subr.mxu0 0.0
    %517 = vmatpush1.msra.mxu0 0.0
    %518 = vmatprep.mubr.f32.mxu0 0.0
    %519 = vmatmul.mubr.f32.gmra.mrb[0].mxu0 %v412
    %v520 = vpop.f32.mrb[0].mxu0
    %v521 = vadd.f32 %v452, %v520
    %v522 = vpop.f32.mrb[0].mxu0
    %523 = vdwg.mxu0
    %525 = vset.pattern.permute.xlu0 0
    %526 = vperm.xlu0 %525, %v430
    %v527 = vpop.permute.xlu0 %526
    %v529 = vadd.f32 %v527, %v521
    %530 = vst [vmem:[#allocation12] sm:$0xff] %v529
    // Predicated region
    $region66: #{tpu_custom_call.1} parent=1 // pred_check
      _
    $region67: #{tpu_custom_call.1} parent=1 // pred_check_branch
      %532 = sbr.rel (0) target = $region69
    $region68: #{tpu_custom_call.1} parent=1 // pred_region
      %s534 = ssub.s32 128, 128
      %535 = vsyncadd [#allocation5], %s534
      %s537 = sshll.u32 [#allocation12], 4
      %s538 = int_to_ptr.vmem [resolvable:$true] %s537
      %540 = dma.vmem_to_hbm [thread:$0]  %s538, 128, %s11, [#allocation5]
    $region69: #{tpu_custom_call.1} parent=1 // pred_fallthru
      _
    // Predicated region
    $region70: #{tpu_custom_call.1} parent=1 // pred_check
      _
    $region71: #{tpu_custom_call.1} parent=1 // pred_check_branch
      %542 = sbr.rel (0) target = $region73
    $region72: #{tpu_custom_call.1} parent=1 // pred_region
      %543 = dma.done [#allocation5], 128
    $region73: #{tpu_custom_call.1} parent=1 // pred_fallthru
      _
    %544 = vsyncpa [#allocation4], 1
    %545 = vsyncpa [#allocation7], 1
    %546 = vsyncpa [#allocation10], 1
    %547 = vsyncpa [#allocation5], 1

</llo_original>
